<compile_context>
chip_gen: v5e
topology: v5e:2x2
jax: 0.10.0
libtpu: 0.0.40
codegen_flags: <defaults>
</compile_context>

<pallas_src>
import functools

import numpy as np

import jax
import jax.numpy as jnp
from jax import lax
from jax.experimental import pallas as pl
from jax.experimental.pallas import tpu as pltpu

N_CONTRACT_2TO2 = 5   # identity, transpose, row-sum, col-sum, total-sum
N_CONTRACT_2TO1 = 3   # diagonal, row-sum, col-sum


# ----------------------------------------------------------------------------
# Host-side constants: 0/1 pooling / broadcast matrices for one batch block.
#   flat index m = b*n*n + i*n + j  (b local to the block, b in [0, bt))
# ----------------------------------------------------------------------------
def _build_pool_mats(bt, n, cdt, with_diag):
    nn = n * n
    m = np.arange(bt * nn)
    b = m // nn
    i = (m % nn) // n
    j = m % n
    btn = bt * n
    ids = np.arange(btn)[None, :]
    p_row = (b * n + i)[:, None] == ids          # pools over j  -> (b, i)
    p_col = (b * n + j)[:, None] == ids          # pools over i  -> (b, j)
    p_tot = b[:, None] == np.arange(bt)[None, :]  # pools over ij -> (b,)
    pmt = np.concatenate([p_row, p_col, p_tot], axis=1).astype(np.float32)  # [M, K]
    pkm = np.ascontiguousarray(pmt.T)                                       # [K, M]
    pdiag = (p_row & (i == j)[:, None]).astype(np.float32) if with_diag else None
    to_dev = lambda a: jnp.asarray(a).astype(cdt)
    return to_dev(pmt), to_dev(pkm), (to_dev(pdiag) if with_diag else None)


# ----------------------------------------------------------------------------
# In-kernel math (channel-major: activations are [C, M] with M = bt*n*n)
# ----------------------------------------------------------------------------
def _pools(h, pmt, btn):
    """rowsum / colsum / totalsum of h via one MXU dot against [P_row|P_col|P_tot]."""
    pools = jnp.dot(h, pmt, preferred_element_type=jnp.float32)   # [C, 2*btn + bt]
    return pools[:, :btn], pools[:, btn:2 * btn], pools[:, 2 * btn:]


def _conv2_pair(h, ht, r, cc, tt, pkm, w_t, bias, *, need_t, relu, cdt):
    """One SnConv2 application on a batch block.

    h, ht : [C, M]  (ht is the per-example spatial transpose of h)
    r, cc, tt : pooled stats of h ([C, btn], [C, btn], [C, bt], f32)
    pkm   : [K, M] broadcast-back matrix, K = 2*btn + bt
    w_t   : [5, Cout, C] pre-transposed weights, bias: [Cout, 1] or None
    Returns (y, yt) each [Cout, M]; yt is None when need_t=False.
    """
    f32 = jnp.float32
    cout = w_t.shape[1]
    w0t, w1t, w2t, w3t, w4t = w_t[0], w_t[1], w_t[2], w_t[3], w_t[4]

    rmix = jnp.dot(w2t, r.astype(cdt), preferred_element_type=f32)    # [Cout, btn]
    cmix = jnp.dot(w3t, cc.astype(cdt), preferred_element_type=f32)   # [Cout, btn]
    cst = jnp.dot(w4t, tt.astype(cdt), preferred_element_type=f32)    # [Cout, bt]
    if bias is not None:
        cst = cst + bias

    if need_t:
        mix = jnp.concatenate(
            [jnp.concatenate([rmix, cmix, cst], axis=1),
             jnp.concatenate([cmix, rmix, cst], axis=1)], axis=0)     # [2Cout, K]
        wm = jnp.concatenate(
            [jnp.concatenate([w0t, w1t], axis=1),
             jnp.concatenate([w1t, w0t], axis=1)], axis=0)            # [2Cout, 2C]
    else:
        mix = jnp.concatenate([rmix, cmix, cst], axis=1)              # [Cout, K]
        wm = jnp.concatenate([w0t, w1t], axis=1)                      # [Cout, 2C]

    ha = jnp.concatenate([h, ht], axis=0)                             # [2C, M]
    out = (jnp.dot(wm, ha, preferred_element_type=f32)
           + jnp.dot(mix.astype(cdt), pkm, preferred_element_type=f32))
    if relu:
        out = jnp.maximum(out, 0.0)
    if need_t:
        return out[:cout].astype(cdt), out[cout:].astype(cdt)
    return out, None


def _node_partial(h, r, cc, pdiag, wn_t, *, cdt):
    """SnConv2to1 contribution (no bias). Returns [Cnode, btn] (f32)."""
    f32 = jnp.float32
    d = jnp.dot(h, pdiag, preferred_element_type=f32)                 # diag -> [C, btn]
    stack = jnp.concatenate([d.astype(cdt), r.astype(cdt), cc.astype(cdt)], axis=0)
    wcat = jnp.concatenate([wn_t[0], wn_t[1], wn_t[2]], axis=1)       # [Cnode, 3C]
    return jnp.dot(wcat, stack, preferred_element_type=f32)


# ----------------------------------------------------------------------------
# Kernels
# ----------------------------------------------------------------------------
def _decoder_kernel(*refs, n_hidden, has_node, skip, btn, cdt, hidden_couts):
    """Whole decoder (hidden SnConv2+ReLU stack, final SnConv2, node head) on one
    lane-dense batch block.  Activations stay resident for the whole pass."""
    f32 = jnp.float32
    idx = 0
    h_ref = refs[idx]; idx += 1
    ht_ref = refs[idx]; idx += 1
    pmt_ref = refs[idx]; idx += 1
    pkm_ref = refs[idx]; idx += 1
    pdiag_ref = None
    if has_node:
        pdiag_ref = refs[idx]; idx += 1
    hidden = []
    for _ in range(n_hidden):
        hidden.append((refs[idx], refs[idx + 1])); idx += 2
    wf_ref, bf_ref = refs[idx], refs[idx + 1]; idx += 2
    wn_ref = bn_ref = None
    if has_node:
        wn_ref, bn_ref = refs[idx], refs[idx + 1]; idx += 2
    y_ref = refs[idx]; idx += 1
    node_ref = refs[idx] if has_node else None

    pmt = pmt_ref[...]
    pkm = pkm_ref[...]
    pdiag = pdiag_ref[...] if has_node else None
    wf = wf_ref[...].astype(cdt)
    bf = bf_ref[...]
    wn = wn_ref[...].astype(cdt) if has_node else None
    bn = bn_ref[...] if has_node else None

    h = h_ref[...].astype(cdt)
    ht = ht_ref[...].astype(cdt)
    r, cc, tt = _pools(h, pmt, btn)

    acc_y = acc_nd = None
    if skip:
        acc_y = jnp.zeros((wf.shape[1], h.shape[1]), f32)
        if has_node:
            acc_nd = jnp.zeros((wn.shape[1], btn), f32)

    off = 0
    for li, (w_ref, b_ref) in enumerate(hidden):
        w = w_ref[...].astype(cdt)
        b = b_ref[...]
        h, ht = _conv2_pair(h, ht, r, cc, tt, pkm, w, b,
                            need_t=True, relu=True, cdt=cdt)
        r, cc, tt = _pools(h, pmt, btn)
        if skip:
            # accumulate this hidden activation's contribution to the final conv
            # (and node head) instead of keeping it live / concatenating channels.
            c_l = hidden_couts[li]
            wf_l = wf[:, :, off:off + c_l]
            acc_y = acc_y + _conv2_pair(h, ht, r, cc, tt, pkm, wf_l, None,
                                        need_t=False, relu=False, cdt=cdt)[0]
            if has_node:
                acc_nd = acc_nd + _node_partial(h, r, cc, pdiag,
                                                wn[:, :, off:off + c_l], cdt=cdt)
            off += c_l

    if skip:
        y = acc_y + bf
        node = (acc_nd + bn) if has_node else None
    else:
        y = _conv2_pair(h, ht, r, cc, tt, pkm, wf, bf,
                        need_t=False, relu=False, cdt=cdt)[0]
        node = (_node_partial(h, r, cc, pdiag, wn, cdt=cdt) + bn) if has_node else None

    y_ref[...] = y.astype(y_ref.dtype)                       # one lane-dense store
    if has_node:
        # Broadcast node values over j with one small dot so the node store is also
        # a full lane-dense slab; the wrapper keeps the j == 0 stripe.
        node_exp = jnp.dot(node.astype(cdt), pkm[:btn, :], preferred_element_type=f32)
        node_ref[...] = node_exp.astype(node_ref.dtype)


def _snconv2_layer_kernel(h_ref, ht_ref, pmt_ref, pkm_ref, w_ref, b_ref,
                          y_ref, yt_ref, *, btn, relu, cdt):
    """One SnConv2 layer (per-layer fallback path): emits y AND y^T so no XLA
    swapaxes HBM round-trip is needed between layers."""
    h = h_ref[...].astype(cdt)
    ht = ht_ref[...].astype(cdt)
    pmt = pmt_ref[...]
    pkm = pkm_ref[...]
    r, cc, tt = _pools(h, pmt, btn)
    y, yt = _conv2_pair(h, ht, r, cc, tt, pkm, w_ref[...].astype(cdt), b_ref[...],
                        need_t=True, relu=relu, cdt=cdt)
    y_ref[...] = y.astype(y_ref.dtype)
    yt_ref[...] = yt.astype(yt_ref.dtype)


# ----------------------------------------------------------------------------
# VMEM planning / block-batch selection
# ----------------------------------------------------------------------------
def _round_up(v, m):
    return -(-v // m) * m


def _tpu_plan():
    kind = ""
    try:
        kind = jax.devices()[0].device_kind.lower()
    except Exception:
        pass
    if "v7" in kind or "7x" in kind:
        # 2 TensorCores / chip, 64 MiB VMEM per core.
        return {"cores": 2, "vmem_limit": 56 << 20, "budget": 40 << 20}
    if "v6" in kind:
        return {"cores": 1, "vmem_limit": 100 << 20, "budget": 72 << 20}
    if "v5" in kind:
        return {"cores": 1, "vmem_limit": 96 << 20, "budget": 64 << 20}
    # Unknown chip: stay conservative and keep the compiler-default VMEM limit.
    return {"cores": 1, "vmem_limit": None, "budget": 24 << 20}


def _compiler_params(plan):
    kw = {"dimension_semantics": ("parallel",)}
    if plan.get("vmem_limit"):
        kw["vmem_limit_bytes"] = int(plan["vmem_limit"])
    return pltpu.CompilerParams(**kw)


def _fused_block_bytes(bt, n, chans, skip, has_node, cdt_bytes):
    """Lane/sublane-padding-aware VMEM estimate for one fused-stack grid step."""
    nn = n * n
    mp = _round_up(bt * nn, 128)
    btn = bt * n
    k = 2 * btn + bt
    cmax = max(chans)
    by = 2 * 2 * _round_up(chans[0], 8) * mp * cdt_bytes            # h/ht blocks, double-buffered
    by += 6 * _round_up(cmax, 8) * mp * 4                           # live activations / layer temps
    if skip:
        by += _round_up(chans[-1], 8) * mp * 4                      # running final accumulator
    by += (_round_up(bt * nn, 8) * _round_up(k, 128)
           + _round_up(k, 8) * mp) * cdt_bytes                      # pooling matrices
    if has_node:
        by += _round_up(bt * nn, 8) * _round_up(btn, 128) * cdt_bytes   # diag selector
        by += 2 * 8 * mp * 4                                            # node out-block
    by += 2 * _round_up(chans[-1], 8) * mp * 4                      # edge out-block
    return by


def _layer_block_bytes(bt, n, c_in, c_out, cdt_bytes):
    nn = n * n
    mp = _round_up(bt * nn, 128)
    k = 2 * bt * n + bt
    by = 2 * 2 * _round_up(c_in, 8) * mp * cdt_bytes
    by += 2 * 2 * 2 * _round_up(c_out, 8) * mp * cdt_bytes          # y and y^T out-blocks
    by += 4 * _round_up(max(c_in, 2 * c_out), 8) * mp * 4
    by += (_round_up(bt * nn, 8) * _round_up(k, 128)
           + _round_up(k, 8) * mp) * cdt_bytes
    return by


def _pick_block_batch(B, nn, fits_fn, plan, block_b=None):
    """Largest block-batch whose lane dim (bt*n*n) is tile-aligned and which fits
    the per-generation VMEM budget.  Only multi-TensorCore chips (v7x) prefer
    >= 4 grid steps (so each core pipelines >= 2 blocks)."""
    if block_b is not None:
        return block_b, True
    cands = [bt for bt in range(1, B + 1)
             if B % bt == 0 and ((bt * nn) % 128 == 0 or bt == B)]
    fitting = [bt for bt in cands if fits_fn(bt)]
    ok = bool(fitting)
    pool = fitting if fitting else cands[:1]
    if plan["cores"] >= 2:
        for min_steps in (4, 2, 1):
            sub = [bt for bt in pool if B // bt >= min_steps]
            if sub:
                return max(sub), ok
    return max(pool), ok


# ----------------------------------------------------------------------------
# pallas_call wrappers
# ----------------------------------------------------------------------------
def _decoder_call(h_cm, ht_cm, hidden, final, node, *, n, bt, skip, cdt,
                  out_dtype, plan):
    """Fused decoder call on channel-major activations.  With hidden=[] it is the
    fused 'final SnConv2 + SnConv2to1' head used by the per-layer fallback."""
    c0, bm = h_cm.shape
    nn = n * n
    m = bt * nn
    btn = bt * n
    has_node = node is not None
    skip = bool(skip and len(hidden) > 0)
    wf_t, bf = final
    cout_f = wf_t.shape[1]
    cnode = node[0].shape[1] if has_node else 0

    pmt, pkm, pdiag = _build_pool_mats(bt, n, cdt, with_diag=has_node)

    inputs = [h_cm, ht_cm, pmt, pkm]
    in_specs = [pl.BlockSpec((c0, m), lambda i: (0, i)),
                pl.BlockSpec((c0, m), lambda i: (0, i)),
                pl.BlockSpec(pmt.shape, lambda i: (0, 0)),
                pl.BlockSpec(pkm.shape, lambda i: (0, 0))]
    if has_node:
        inputs.append(pdiag)
        in_specs.append(pl.BlockSpec(pdiag.shape, lambda i: (0, 0)))
    hidden_couts = []
    for (w_t, b) in hidden:
        hidden_couts.append(w_t.shape[1])
        inputs += [w_t, b]
        in_specs += [pl.BlockSpec(w_t.shape, lambda i: (0, 0, 0)),
                     pl.BlockSpec(b.shape, lambda i: (0, 0))]
    inputs += [wf_t, bf]
    in_specs += [pl.BlockSpec(wf_t.shape, lambda i: (0, 0, 0)),
                 pl.BlockSpec(bf.shape, lambda i: (0, 0))]
    if has_node:
        wn_t, bn = node
        inputs += [wn_t, bn]
        in_specs += [pl.BlockSpec(wn_t.shape, lambda i: (0, 0, 0)),
                     pl.BlockSpec(bn.shape, lambda i: (0, 0))]

    out_shape = [jax.ShapeDtypeStruct((cout_f, bm), out_dtype)]
    out_specs = [pl.BlockSpec((cout_f, m), lambda i: (0, i))]
    if has_node:
        out_shape.append(jax.ShapeDtypeStruct((cnode, bm), out_dtype))
        out_specs.append(pl.BlockSpec((cnode, m), lambda i: (0, i)))

    kern = functools.partial(_decoder_kernel, n_hidden=len(hidden),
                             has_node=has_node, skip=skip, btn=btn, cdt=cdt,
                             hidden_couts=tuple(hidden_couts))
    res = pl.pallas_call(
        kern,
        out_shape=tuple(out_shape),
        grid=(bm // m,),
        in_specs=in_specs,
        out_specs=tuple(out_specs),
        compiler_params=_compiler_params(plan),
    )(*inputs)
    return (res[0], res[1]) if has_node else (res[0], None)


def _snconv2_layer_call(h_cm, ht_cm, w_t, b, *, n, bt, relu, cdt, plan):
    c_in, bm = h_cm.shape
    nn = n * n
    m = bt * nn
    btn = bt * n
    c_out = w_t.shape[1]
    pmt, pkm, _ = _build_pool_mats(bt, n, cdt, with_diag=False)
    kern = functools.partial(_snconv2_layer_kernel, btn=btn, relu=relu, cdt=cdt)
    return pl.pallas_call(
        kern,
        out_shape=(jax.ShapeDtypeStruct((c_out, bm), cdt),
                   jax.ShapeDtypeStruct((c_out, bm), cdt)),
        grid=(bm // m,),
        in_specs=[pl.BlockSpec((c_in, m), lambda i: (0, i)),
                  pl.BlockSpec((c_in, m), lambda i: (0, i)),
                  pl.BlockSpec(pmt.shape, lambda i: (0, 0)),
                  pl.BlockSpec(pkm.shape, lambda i: (0, 0)),
                  pl.BlockSpec(w_t.shape, lambda i: (0, 0, 0)),
                  pl.BlockSpec(b.shape, lambda i: (0, 0))],
        out_specs=(pl.BlockSpec((c_out, m), lambda i: (0, i)),
                   pl.BlockSpec((c_out, m), lambda i: (0, i))),
        compiler_params=_compiler_params(plan),
    )(h_cm, ht_cm, pmt, pkm, w_t, b)


def _forward_per_layer(h_cm, ht_cm, params_t, *, n, B, skip, cdt, out_dtype, plan):
    """Fallback for stacks too large to keep resident in VMEM.
    TODO(synk): very large n would additionally need a spatial-tile grid axis."""
    nn = n * n
    cbytes = np.dtype(cdt).itemsize
    acts = []
    for (w_t, b) in params_t["hidden"]:
        c_in, c_out = w_t.shape[2], w_t.shape[1]
        bt, _ = _pick_block_batch(
            B, nn,
            lambda t, ci=c_in, co=c_out: _layer_block_bytes(t, n, ci, co, cbytes) <= plan["budget"],
            plan)
        h_cm, ht_cm = _snconv2_layer_call(h_cm, ht_cm, w_t, b, n=n, bt=bt,
                                          relu=True, cdt=cdt, plan=plan)
        if skip:
            acts.append((h_cm, ht_cm))
    if skip and acts:
        # channel-major concat = major-axis concat (contiguous, lane-dense)
        h_cm = jnp.concatenate([a for a, _ in acts], axis=0)
        ht_cm = jnp.concatenate([t for _, t in acts], axis=0)
    final, node = params_t["final"], params_t["node"]
    chans = [final[0].shape[2], final[0].shape[1]]
    bt, _ = _pick_block_batch(
        B, nn,
        lambda t: _fused_block_bytes(t, n, chans, False, node is not None, cbytes) <= plan["budget"],
        plan)
    return _decoder_call(h_cm, ht_cm, [], final, node, n=n, bt=bt, skip=False,
                         cdt=cdt, out_dtype=out_dtype, plan=plan)


# ----------------------------------------------------------------------------
# Sn2dDecoder: parameters + forward
# ----------------------------------------------------------------------------
def init_decoder_params(key, in_channels, hidden_channel_list, out_channels,
                        out_node_channels=0, skip_conn=False):
    """Deterministic Linear-style init. Weights are [n_terms, C_in, C_out];
    biases [1, C_out] (reference-friendly layout; the wrapper pre-transposes)."""
    params = {"hidden": [], "final": None, "node": None}
    c_in = in_channels
    for c_out in hidden_channel_list:
        key, k1, k2 = jax.random.split(key, 3)
        bound = 1.0 / float(N_CONTRACT_2TO2 * c_in) ** 0.5
        w = jax.random.uniform(k1, (N_CONTRACT_2TO2, c_in, c_out), jnp.float32,
                               -bound, bound)
        b = jax.random.uniform(k2, (1, c_out), jnp.float32, -bound, bound)
        params["hidden"].append((w, b))
        c_in = c_out
    c_final = sum(hidden_channel_list) if (skip_conn and hidden_channel_list) else c_in
    key, k1, k2 = jax.random.split(key, 3)
    bound = 1.0 / float(N_CONTRACT_2TO2 * c_final) ** 0.5
    params["final"] = (
        jax.random.uniform(k1, (N_CONTRACT_2TO2, c_final, out_channels),
                           jnp.float32, -bound, bound),
        jax.random.uniform(k2, (1, out_channels), jnp.float32, -bound, bound))
    if out_node_channels > 0:
        key, k1, k2 = jax.random.split(key, 3)
        bound = 1.0 / float(N_CONTRACT_2TO1 * c_final) ** 0.5
        params["node"] = (
            jax.random.uniform(k1, (N_CONTRACT_2TO1, c_final, out_node_channels),
                               jnp.float32, -bound, bound),
            jax.random.uniform(k2, (1, out_node_channels), jnp.float32, -bound, bound))
    return params


def _transpose_params(params):
    tp = lambda w: jnp.swapaxes(w, 1, 2)        # [T, Cin, Cout] -> [T, Cout, Cin]
    tb = lambda b: jnp.reshape(b, (-1, 1))      # [1, Cout]      -> [Cout, 1]
    hidden = [(tp(w), tb(b)) for (w, b) in params["hidden"]]
    final = (tp(params["final"][0]), tb(params["final"][1]))
    node = None
    if params["node"] is not None:
        node = (tp(params["node"][0]), tb(params["node"][1]))
    return {"hidden": hidden, "final": final, "node": node}


def sn2d_decoder_forward(x, params, *, skip_conn=False, mask=None,
                         matmul_dtype=jnp.float32, fuse_stack=None, block_b=None):
    """Mirrors Sn2dDecoder.forward. x: [B, n, n, C_in].  Returns x_out
    [B, n, n, C_out] or (x_out, x_node [B, n, C_node])."""
    assert mask is None  # TODO(synk): mask path (graphs of unequal size) not implemented.
    B, n, n2, c0 = x.shape
    assert n == n2
    nn = n * n
    cdt = np.dtype(matmul_dtype)
    plan = _tpu_plan()
    params_t = _transpose_params(params)
    hidden, final, node = params_t["hidden"], params_t["final"], params_t["node"]

    # Channel-major, spatially flattened, lane-dense layouts (one-time XLA
    # relayouts at the boundary; all kernel traffic stays lane-dense).
    x_cm = jnp.transpose(x, (3, 0, 1, 2)).reshape(c0, B * nn)
    xt_cm = jnp.transpose(x, (3, 0, 2, 1)).reshape(c0, B * nn)
    if cdt != np.dtype(x.dtype):
        x_cm = x_cm.astype(cdt)
        xt_cm = xt_cm.astype(cdt)

    chans = [c0] + [w.shape[1] for (w, _) in hidden] + [final[0].shape[1]]
    fits_fn = lambda bt: _fused_block_bytes(
        bt, n, chans, skip_conn and len(hidden) > 0, node is not None,
        cdt.itemsize) <= plan["budget"]
    bt, fits = _pick_block_batch(B, nn, fits_fn, plan, block_b=block_b)
    if fuse_stack is None:
        fuse_stack = fits

    if fuse_stack:
        y_cm, node_cm = _decoder_call(x_cm, xt_cm, hidden, final, node, n=n, bt=bt,
                                      skip=skip_conn, cdt=cdt, out_dtype=x.dtype,
                                      plan=plan)
    else:
        y_cm, node_cm = _forward_per_layer(x_cm, xt_cm, params_t, n=n, B=B,
                                           skip=skip_conn, cdt=cdt,
                                           out_dtype=x.dtype, plan=plan)

    cout_f = final[0].shape[1]
    y = jnp.transpose(y_cm.reshape(cout_f, B, n, n), (1, 2, 3, 0))
    if node is None:
        return y
    cnode = node[0].shape[1]
    x_node = jnp.transpose(node_cm.reshape(cnode, B, n, n)[:, :, :, 0], (1, 2, 0))
    return y, x_node


# ----------------------------------------------------------------------------
# Pure-JAX reference (correctness check only)
# ----------------------------------------------------------------------------
_HI = lax.Precision.HIGHEST


def _snconv2_ref(x, w5, b, apply_relu):
    terms = [
        x,
        jnp.swapaxes(x, 1, 2),
        jnp.broadcast_to(jnp.sum(x, axis=2, keepdims=True), x.shape),
        jnp.broadcast_to(jnp.sum(x, axis=1, keepdims=True), x.shape),
        jnp.broadcast_to(jnp.sum(x, axis=(1, 2), keepdims=True), x.shape),
    ]
    y = sum(jnp.einsum("bijc,cd->bijd", t, w5[k], precision=_HI)
            for k, t in enumerate(terms)) + b
    return jnp.maximum(y, 0.0) if apply_relu else y


def _snconv2to1_ref(x, w3, b):
    n = x.shape[1]
    idx = jnp.arange(n)
    diag = x[:, idx, idx, :]
    rowsum = jnp.sum(x, axis=2)
    colsum = jnp.sum(x, axis=1)
    y = (jnp.einsum("bnc,cd->bnd", diag, w3[0], precision=_HI)
         + jnp.einsum("bnc,cd->bnd", rowsum, w3[1], precision=_HI)
         + jnp.einsum("bnc,cd->bnd", colsum, w3[2], precision=_HI))
    return y + b


def _decoder_ref(x, params, skip_conn=False):
    acts = []
    for (w, b) in params["hidden"]:
        x = _snconv2_ref(x, w, b, True)
        if skip_conn:
            acts.append(x)
    if skip_conn and acts:
        x = jnp.concatenate(acts, axis=3)
    x_out = _snconv2_ref(x, *params["final"], False)
    if params["node"] is None:
        return x_out
    return x_out, _snconv2to1_ref(x, *params["node"])


# ----------------------------------------------------------------------------
if __name__ == "__main__":
    B, n, Cin = 4, 8, 4
    hidden_channel_list = [8, 16]
    Cout, Cnode = 4, 3

    x = jax.random.normal(jax.random.PRNGKey(0), (B, n, n, Cin), jnp.float32)
    params = init_decoder_params(jax.random.PRNGKey(1), Cin, hidden_channel_list,
                                 Cout, out_node_channels=Cnode)
    params_nonode = init_decoder_params(jax.random.PRNGKey(2), Cin,
                                        hidden_channel_list, Cout,
                                        out_node_channels=0)
    params_skip = init_decoder_params(jax.random.PRNGKey(3), Cin,
                                      hidden_channel_list, Cout,
                                      out_node_channels=Cnode, skip_conn=True)

    ref_y, ref_nd = _decoder_ref(x, params)
    ref_y_sk, ref_nd_sk = _decoder_ref(x, params_skip, skip_conn=True)
    ref_y_nn = _decoder_ref(x, params_nonode)

    def check(got, want, tol, msg):
        # scale-aware check: robust to MXU f32/bf16 pass decomposition while still
        # catching any term-wiring error (which produces O(scale) differences).
        err = float(jnp.max(jnp.abs(got - want)))
        scale = float(jnp.max(jnp.abs(want))) + 1e-6
        assert err <= tol * scale, f"{msg}: err={err:.4e} scale={scale:.4e}"

    # 1) fused whole-stack path, f32 matmuls, auto block-batch
    y1, nd1 = sn2d_decoder_forward(x, params)
    # 2) fused path with an explicit 2-example block (exercises grid > 1)
    y2, nd2 = sn2d_decoder_forward(x, params, block_b=2)
    # 3) per-layer fallback (layer kernels emit y and y^T; final + node fused)
    y3, nd3 = sn2d_decoder_forward(x, params, fuse_stack=False)
    # 4) skip connections (accumulated final-conv partials in the fused kernel)
    y4, nd4 = sn2d_decoder_forward(x, params_skip, skip_conn=True)
    # 5) no node head
    y5 = sn2d_decoder_forward(x, params_nonode)
    # 6) bf16 matmul operands, f32 accumulation (v6e/v7x MXU-friendly mode)
    y6, nd6 = sn2d_decoder_forward(x, params, matmul_dtype=jnp.bfloat16)
    jax.block_until_ready((y1, nd1, y2, nd2, y3, nd3, y4, nd4, y5, y6, nd6))

    assert y1.shape == (B, n, n, Cout) and nd1.shape == (B, n, Cnode)
    check(y1, ref_y, 2e-2, "fused edge")
    check(nd1, ref_nd, 2e-2, "fused node")
    check(y2, ref_y, 2e-2, "fused(blocked) edge")
    check(nd2, ref_nd, 2e-2, "fused(blocked) node")
    check(y3, ref_y, 2e-2, "per-layer edge")
    check(nd3, ref_nd, 2e-2, "per-layer node")
    check(y4, ref_y_sk, 2e-2, "skip edge")
    check(nd4, ref_nd_sk, 2e-2, "skip node")
    check(y5, ref_y_nn, 2e-2, "no-node edge")
    check(y6, ref_y, 6e-2, "bf16 edge")
    check(nd6, ref_nd, 6e-2, "bf16 node")

    print("KERNEL_OK")
</pallas_src>

<mosaic_0001>
module attributes {stable_mosaic.version = 11 : i64} {
  func.func @_decoder_kernel(%arg0: i32, %arg1: memref<4x256xf32, #tpu.memory_space<vmem>>, %arg2: memref<4x256xf32, #tpu.memory_space<vmem>>, %arg3: memref<256x68xf32, #tpu.memory_space<vmem>>, %arg4: memref<68x256xf32, #tpu.memory_space<vmem>>, %arg5: memref<256x32xf32, #tpu.memory_space<vmem>>, %arg6: memref<5x8x4xf32, #tpu.memory_space<vmem>>, %arg7: memref<8x1xf32, #tpu.memory_space<vmem>>, %arg8: memref<5x16x8xf32, #tpu.memory_space<vmem>>, %arg9: memref<16x1xf32, #tpu.memory_space<vmem>>, %arg10: memref<5x4x16xf32, #tpu.memory_space<vmem>>, %arg11: memref<4x1xf32, #tpu.memory_space<vmem>>, %arg12: memref<3x3x16xf32, #tpu.memory_space<vmem>>, %arg13: memref<3x1xf32, #tpu.memory_space<vmem>>, %arg14: memref<4x256xf32, #tpu.memory_space<vmem>>, %arg15: memref<3x256xf32, #tpu.memory_space<vmem>>) attributes {dimension_semantics = [#tpu.dimension_semantics<parallel>], iteration_bounds = array<i64: 1>, scalar_prefetch = 0 : i64, scratch_operands = 0 : i64, tpu.core_type = #tpu.core_type<tc>, window_params = [{transform_indices = @transform_0, window_bounds = array<i64: 4, 256>}, {transform_indices = @transform_1, window_bounds = array<i64: 4, 256>}, {pipeline_mode = #tpu.pipeline_mode<synchronous>, transform_indices = @transform_2, window_bounds = array<i64: 256, 68>}, {pipeline_mode = #tpu.pipeline_mode<synchronous>, transform_indices = @transform_3, window_bounds = array<i64: 68, 256>}, {pipeline_mode = #tpu.pipeline_mode<synchronous>, transform_indices = @transform_4, window_bounds = array<i64: 256, 32>}, {pipeline_mode = #tpu.pipeline_mode<synchronous>, transform_indices = @transform_5, window_bounds = array<i64: 5, 8, 4>}, {pipeline_mode = #tpu.pipeline_mode<synchronous>, transform_indices = @transform_6, window_bounds = array<i64: 8, 1>}, {pipeline_mode = #tpu.pipeline_mode<synchronous>, transform_indices = @transform_7, window_bounds = array<i64: 5, 16, 8>}, {pipeline_mode = #tpu.pipeline_mode<synchronous>, transform_indices = @transform_8, window_bounds = array<i64: 16, 1>}, {pipeline_mode = #tpu.pipeline_mode<synchronous>, transform_indices = @transform_9, window_bounds = array<i64: 5, 4, 16>}, {pipeline_mode = #tpu.pipeline_mode<synchronous>, transform_indices = @transform_10, window_bounds = array<i64: 4, 1>}, {pipeline_mode = #tpu.pipeline_mode<synchronous>, transform_indices = @transform_11, window_bounds = array<i64: 3, 3, 16>}, {pipeline_mode = #tpu.pipeline_mode<synchronous>, transform_indices = @transform_12, window_bounds = array<i64: 3, 1>}, {transform_indices = @transform_13, window_bounds = array<i64: 4, 256>}, {transform_indices = @transform_14, window_bounds = array<i64: 3, 256>}]} {
    %c0 = arith.constant 0 : index
    %c0_0 = arith.constant 0 : index
    %0 = vector.load %arg3[%c0, %c0_0] : memref<256x68xf32, #tpu.memory_space<vmem>>, vector<256x68xf32>
    %c0_1 = arith.constant 0 : index
    %c0_2 = arith.constant 0 : index
    %1 = vector.load %arg4[%c0_1, %c0_2] : memref<68x256xf32, #tpu.memory_space<vmem>>, vector<68x256xf32>
    %c0_3 = arith.constant 0 : index
    %c0_4 = arith.constant 0 : index
    %2 = vector.load %arg5[%c0_3, %c0_4] : memref<256x32xf32, #tpu.memory_space<vmem>>, vector<256x32xf32>
    %c0_5 = arith.constant 0 : index
    %c0_6 = arith.constant 0 : index
    %c0_7 = arith.constant 0 : index
    %3 = vector.load %arg10[%c0_5, %c0_6, %c0_7] : memref<5x4x16xf32, #tpu.memory_space<vmem>>, vector<5x4x16xf32>
    %c0_8 = arith.constant 0 : index
    %c0_9 = arith.constant 0 : index
    %4 = vector.load %arg11[%c0_8, %c0_9] : memref<4x1xf32, #tpu.memory_space<vmem>>, vector<4x1xf32>
    %c0_10 = arith.constant 0 : index
    %c0_11 = arith.constant 0 : index
    %c0_12 = arith.constant 0 : index
    %5 = vector.load %arg12[%c0_10, %c0_11, %c0_12] : memref<3x3x16xf32, #tpu.memory_space<vmem>>, vector<3x3x16xf32>
    %c0_13 = arith.constant 0 : index
    %c0_14 = arith.constant 0 : index
    %6 = vector.load %arg13[%c0_13, %c0_14] : memref<3x1xf32, #tpu.memory_space<vmem>>, vector<3x1xf32>
    %c0_15 = arith.constant 0 : index
    %c0_16 = arith.constant 0 : index
    %7 = vector.load %arg1[%c0_15, %c0_16] : memref<4x256xf32, #tpu.memory_space<vmem>>, vector<4x256xf32>
    %c0_17 = arith.constant 0 : index
    %c0_18 = arith.constant 0 : index
    %8 = vector.load %arg2[%c0_17, %c0_18] : memref<4x256xf32, #tpu.memory_space<vmem>>, vector<4x256xf32>
    %cst = arith.constant dense<0.000000e+00> : vector<4x68xf32>
    %9 = tpu.matmul %7, %0, %cst {dimension_numbers = #tpu.dot_dimension_numbers<[1], [0], [0], [1], [0, 0, 1, 1], [], []>} : vector<4x256xf32>, vector<256x68xf32>, vector<4x68xf32> -> vector<4x68xf32>
    %10 = vector.extract_strided_slice %9 {offsets = [0, 0], sizes = [4, 32], strides = [1, 1]} : vector<4x68xf32> to vector<4x32xf32>
    %11 = vector.extract_strided_slice %9 {offsets = [0, 32], sizes = [4, 32], strides = [1, 1]} : vector<4x68xf32> to vector<4x32xf32>
    %12 = vector.extract_strided_slice %9 {offsets = [0, 64], sizes = [4, 4], strides = [1, 1]} : vector<4x68xf32> to vector<4x4xf32>
    %c0_19 = arith.constant 0 : index
    %c0_20 = arith.constant 0 : index
    %c0_21 = arith.constant 0 : index
    %13 = vector.load %arg6[%c0_19, %c0_20, %c0_21] : memref<5x8x4xf32, #tpu.memory_space<vmem>>, vector<5x8x4xf32>
    %c0_22 = arith.constant 0 : index
    %c0_23 = arith.constant 0 : index
    %14 = vector.load %arg7[%c0_22, %c0_23] : memref<8x1xf32, #tpu.memory_space<vmem>>, vector<8x1xf32>
    %15 = vector.extract_strided_slice %13 {offsets = [0, 0, 0], sizes = [1, 8, 4], strides = [1, 1, 1]} : vector<5x8x4xf32> to vector<1x8x4xf32>
    %16 = vector.shape_cast %15 : vector<1x8x4xf32> to vector<8x4xf32>
    %17 = vector.extract_strided_slice %13 {offsets = [1, 0, 0], sizes = [1, 8, 4], strides = [1, 1, 1]} : vector<5x8x4xf32> to vector<1x8x4xf32>
    %18 = vector.shape_cast %17 : vector<1x8x4xf32> to vector<8x4xf32>
    %19 = vector.extract_strided_slice %13 {offsets = [2, 0, 0], sizes = [1, 8, 4], strides = [1, 1, 1]} : vector<5x8x4xf32> to vector<1x8x4xf32>
    %20 = vector.shape_cast %19 : vector<1x8x4xf32> to vector<8x4xf32>
    %21 = vector.extract_strided_slice %13 {offsets = [3, 0, 0], sizes = [1, 8, 4], strides = [1, 1, 1]} : vector<5x8x4xf32> to vector<1x8x4xf32>
    %22 = vector.shape_cast %21 : vector<1x8x4xf32> to vector<8x4xf32>
    %23 = vector.extract_strided_slice %13 {offsets = [4, 0, 0], sizes = [1, 8, 4], strides = [1, 1, 1]} : vector<5x8x4xf32> to vector<1x8x4xf32>
    %24 = vector.shape_cast %23 : vector<1x8x4xf32> to vector<8x4xf32>
    %cst_24 = arith.constant dense<0.000000e+00> : vector<8x32xf32>
    %25 = tpu.matmul %20, %10, %cst_24 {dimension_numbers = #tpu.dot_dimension_numbers<[1], [0], [0], [1], [0, 0, 1, 1], [], []>} : vector<8x4xf32>, vector<4x32xf32>, vector<8x32xf32> -> vector<8x32xf32>
    %cst_25 = arith.constant dense<0.000000e+00> : vector<8x32xf32>
    %26 = tpu.matmul %22, %11, %cst_25 {dimension_numbers = #tpu.dot_dimension_numbers<[1], [0], [0], [1], [0, 0, 1, 1], [], []>} : vector<8x4xf32>, vector<4x32xf32>, vector<8x32xf32> -> vector<8x32xf32>
    %cst_26 = arith.constant dense<0.000000e+00> : vector<8x4xf32>
    %27 = tpu.matmul %24, %12, %cst_26 {dimension_numbers = #tpu.dot_dimension_numbers<[1], [0], [0], [1], [0, 0, 1, 1], [], []>} : vector<8x4xf32>, vector<4x4xf32>, vector<8x4xf32> -> vector<8x4xf32>
    %28 = vector.broadcast %14 : vector<8x1xf32> to vector<8x4xf32>
    %29 = arith.addf %27, %28 : vector<8x4xf32>
    %30 = tpu.concatenate %25, %26, %29 in 1 : vector<8x32xf32>, vector<8x32xf32>, vector<8x4xf32> -> vector<8x68xf32>
    %31 = tpu.concatenate %26, %25, %29 in 1 : vector<8x32xf32>, vector<8x32xf32>, vector<8x4xf32> -> vector<8x68xf32>
    %32 = tpu.concatenate %30, %31 in 0 : vector<8x68xf32>, vector<8x68xf32> -> vector<16x68xf32>
    %33 = tpu.concatenate %16, %18 in 1 : vector<8x4xf32>, vector<8x4xf32> -> vector<8x8xf32>
    %34 = tpu.concatenate %18, %16 in 1 : vector<8x4xf32>, vector<8x4xf32> -> vector<8x8xf32>
    %35 = tpu.concatenate %33, %34 in 0 : vector<8x8xf32>, vector<8x8xf32> -> vector<16x8xf32>
    %36 = tpu.concatenate %7, %8 in 0 : vector<4x256xf32>, vector<4x256xf32> -> vector<8x256xf32>
    %cst_27 = arith.constant dense<0.000000e+00> : vector<16x256xf32>
    %37 = tpu.matmul %35, %36, %cst_27 {dimension_numbers = #tpu.dot_dimension_numbers<[1], [0], [0], [1], [0, 0, 1, 1], [], []>} : vector<16x8xf32>, vector<8x256xf32>, vector<16x256xf32> -> vector<16x256xf32>
    %cst_28 = arith.constant dense<0.000000e+00> : vector<16x256xf32>
    %38 = tpu.matmul %32, %1, %cst_28 {dimension_numbers = #tpu.dot_dimension_numbers<[1], [0], [0], [1], [0, 0, 1, 1], [], []>} : vector<16x68xf32>, vector<68x256xf32>, vector<16x256xf32> -> vector<16x256xf32>
    %39 = arith.addf %37, %38 : vector<16x256xf32>
    %cst_29 = arith.constant 0.000000e+00 : f32
    %40 = vector.broadcast %cst_29 : f32 to vector<16x256xf32>
    %41 = arith.maximumf %39, %40 : vector<16x256xf32>
    %42 = vector.extract_strided_slice %41 {offsets = [0, 0], sizes = [8, 256], strides = [1, 1]} : vector<16x256xf32> to vector<8x256xf32>
    %43 = vector.extract_strided_slice %41 {offsets = [8, 0], sizes = [8, 256], strides = [1, 1]} : vector<16x256xf32> to vector<8x256xf32>
    %cst_30 = arith.constant dense<0.000000e+00> : vector<8x68xf32>
    %44 = tpu.matmul %42, %0, %cst_30 {dimension_numbers = #tpu.dot_dimension_numbers<[1], [0], [0], [1], [0, 0, 1, 1], [], []>} : vector<8x256xf32>, vector<256x68xf32>, vector<8x68xf32> -> vector<8x68xf32>
    %45 = vector.extract_strided_slice %44 {offsets = [0, 0], sizes = [8, 32], strides = [1, 1]} : vector<8x68xf32> to vector<8x32xf32>
    %46 = vector.extract_strided_slice %44 {offsets = [0, 32], sizes = [8, 32], strides = [1, 1]} : vector<8x68xf32> to vector<8x32xf32>
    %47 = vector.extract_strided_slice %44 {offsets = [0, 64], sizes = [8, 4], strides = [1, 1]} : vector<8x68xf32> to vector<8x4xf32>
    %c0_31 = arith.constant 0 : index
    %c0_32 = arith.constant 0 : index
    %c0_33 = arith.constant 0 : index
    %48 = vector.load %arg8[%c0_31, %c0_32, %c0_33] : memref<5x16x8xf32, #tpu.memory_space<vmem>>, vector<5x16x8xf32>
    %c0_34 = arith.constant 0 : index
    %c0_35 = arith.constant 0 : index
    %49 = vector.load %arg9[%c0_34, %c0_35] : memref<16x1xf32, #tpu.memory_space<vmem>>, vector<16x1xf32>
    %50 = vector.extract_strided_slice %48 {offsets = [0, 0, 0], sizes = [1, 16, 8], strides = [1, 1, 1]} : vector<5x16x8xf32> to vector<1x16x8xf32>
    %51 = vector.shape_cast %50 : vector<1x16x8xf32> to vector<16x8xf32>
    %52 = vector.extract_strided_slice %48 {offsets = [1, 0, 0], sizes = [1, 16, 8], strides = [1, 1, 1]} : vector<5x16x8xf32> to vector<1x16x8xf32>
    %53 = vector.shape_cast %52 : vector<1x16x8xf32> to vector<16x8xf32>
    %54 = vector.extract_strided_slice %48 {offsets = [2, 0, 0], sizes = [1, 16, 8], strides = [1, 1, 1]} : vector<5x16x8xf32> to vector<1x16x8xf32>
    %55 = vector.shape_cast %54 : vector<1x16x8xf32> to vector<16x8xf32>
    %56 = vector.extract_strided_slice %48 {offsets = [3, 0, 0], sizes = [1, 16, 8], strides = [1, 1, 1]} : vector<5x16x8xf32> to vector<1x16x8xf32>
    %57 = vector.shape_cast %56 : vector<1x16x8xf32> to vector<16x8xf32>
    %58 = vector.extract_strided_slice %48 {offsets = [4, 0, 0], sizes = [1, 16, 8], strides = [1, 1, 1]} : vector<5x16x8xf32> to vector<1x16x8xf32>
    %59 = vector.shape_cast %58 : vector<1x16x8xf32> to vector<16x8xf32>
    %cst_36 = arith.constant dense<0.000000e+00> : vector<16x32xf32>
    %60 = tpu.matmul %55, %45, %cst_36 {dimension_numbers = #tpu.dot_dimension_numbers<[1], [0], [0], [1], [0, 0, 1, 1], [], []>} : vector<16x8xf32>, vector<8x32xf32>, vector<16x32xf32> -> vector<16x32xf32>
    %cst_37 = arith.constant dense<0.000000e+00> : vector<16x32xf32>
    %61 = tpu.matmul %57, %46, %cst_37 {dimension_numbers = #tpu.dot_dimension_numbers<[1], [0], [0], [1], [0, 0, 1, 1], [], []>} : vector<16x8xf32>, vector<8x32xf32>, vector<16x32xf32> -> vector<16x32xf32>
    %cst_38 = arith.constant dense<0.000000e+00> : vector<16x4xf32>
    %62 = tpu.matmul %59, %47, %cst_38 {dimension_numbers = #tpu.dot_dimension_numbers<[1], [0], [0], [1], [0, 0, 1, 1], [], []>} : vector<16x8xf32>, vector<8x4xf32>, vector<16x4xf32> -> vector<16x4xf32>
    %63 = vector.broadcast %49 : vector<16x1xf32> to vector<16x4xf32>
    %64 = arith.addf %62, %63 : vector<16x4xf32>
    %65 = tpu.concatenate %60, %61, %64 in 1 : vector<16x32xf32>, vector<16x32xf32>, vector<16x4xf32> -> vector<16x68xf32>
    %66 = tpu.concatenate %61, %60, %64 in 1 : vector<16x32xf32>, vector<16x32xf32>, vector<16x4xf32> -> vector<16x68xf32>
    %67 = tpu.concatenate %65, %66 in 0 : vector<16x68xf32>, vector<16x68xf32> -> vector<32x68xf32>
    %68 = tpu.concatenate %51, %53 in 1 : vector<16x8xf32>, vector<16x8xf32> -> vector<16x16xf32>
    %69 = tpu.concatenate %53, %51 in 1 : vector<16x8xf32>, vector<16x8xf32> -> vector<16x16xf32>
    %70 = tpu.concatenate %68, %69 in 0 : vector<16x16xf32>, vector<16x16xf32> -> vector<32x16xf32>
    %71 = tpu.concatenate %42, %43 in 0 : vector<8x256xf32>, vector<8x256xf32> -> vector<16x256xf32>
    %cst_39 = arith.constant dense<0.000000e+00> : vector<32x256xf32>
    %72 = tpu.matmul %70, %71, %cst_39 {dimension_numbers = #tpu.dot_dimension_numbers<[1], [0], [0], [1], [0, 0, 1, 1], [], []>} : vector<32x16xf32>, vector<16x256xf32>, vector<32x256xf32> -> vector<32x256xf32>
    %cst_40 = arith.constant dense<0.000000e+00> : vector<32x256xf32>
    %73 = tpu.matmul %67, %1, %cst_40 {dimension_numbers = #tpu.dot_dimension_numbers<[1], [0], [0], [1], [0, 0, 1, 1], [], []>} : vector<32x68xf32>, vector<68x256xf32>, vector<32x256xf32> -> vector<32x256xf32>
    %74 = arith.addf %72, %73 : vector<32x256xf32>
    %cst_41 = arith.constant 0.000000e+00 : f32
    %75 = vector.broadcast %cst_41 : f32 to vector<32x256xf32>
    %76 = arith.maximumf %74, %75 : vector<32x256xf32>
    %77 = vector.extract_strided_slice %76 {offsets = [0, 0], sizes = [16, 256], strides = [1, 1]} : vector<32x256xf32> to vector<16x256xf32>
    %78 = vector.extract_strided_slice %76 {offsets = [16, 0], sizes = [16, 256], strides = [1, 1]} : vector<32x256xf32> to vector<16x256xf32>
    %cst_42 = arith.constant dense<0.000000e+00> : vector<16x68xf32>
    %79 = tpu.matmul %77, %0, %cst_42 {dimension_numbers = #tpu.dot_dimension_numbers<[1], [0], [0], [1], [0, 0, 1, 1], [], []>} : vector<16x256xf32>, vector<256x68xf32>, vector<16x68xf32> -> vector<16x68xf32>
    %80 = vector.extract_strided_slice %79 {offsets = [0, 0], sizes = [16, 32], strides = [1, 1]} : vector<16x68xf32> to vector<16x32xf32>
    %81 = vector.extract_strided_slice %79 {offsets = [0, 32], sizes = [16, 32], strides = [1, 1]} : vector<16x68xf32> to vector<16x32xf32>
    %82 = vector.extract_strided_slice %79 {offsets = [0, 64], sizes = [16, 4], strides = [1, 1]} : vector<16x68xf32> to vector<16x4xf32>
    %83 = vector.extract_strided_slice %3 {offsets = [0, 0, 0], sizes = [1, 4, 16], strides = [1, 1, 1]} : vector<5x4x16xf32> to vector<1x4x16xf32>
    %84 = vector.shape_cast %83 : vector<1x4x16xf32> to vector<4x16xf32>
    %85 = vector.extract_strided_slice %3 {offsets = [1, 0, 0], sizes = [1, 4, 16], strides = [1, 1, 1]} : vector<5x4x16xf32> to vector<1x4x16xf32>
    %86 = vector.shape_cast %85 : vector<1x4x16xf32> to vector<4x16xf32>
    %87 = vector.extract_strided_slice %3 {offsets = [2, 0, 0], sizes = [1, 4, 16], strides = [1, 1, 1]} : vector<5x4x16xf32> to vector<1x4x16xf32>
    %88 = vector.shape_cast %87 : vector<1x4x16xf32> to vector<4x16xf32>
    %89 = vector.extract_strided_slice %3 {offsets = [3, 0, 0], sizes = [1, 4, 16], strides = [1, 1, 1]} : vector<5x4x16xf32> to vector<1x4x16xf32>
    %90 = vector.shape_cast %89 : vector<1x4x16xf32> to vector<4x16xf32>
    %91 = vector.extract_strided_slice %3 {offsets = [4, 0, 0], sizes = [1, 4, 16], strides = [1, 1, 1]} : vector<5x4x16xf32> to vector<1x4x16xf32>
    %92 = vector.shape_cast %91 : vector<1x4x16xf32> to vector<4x16xf32>
    %cst_43 = arith.constant dense<0.000000e+00> : vector<4x32xf32>
    %93 = tpu.matmul %88, %80, %cst_43 {dimension_numbers = #tpu.dot_dimension_numbers<[1], [0], [0], [1], [0, 0, 1, 1], [], []>} : vector<4x16xf32>, vector<16x32xf32>, vector<4x32xf32> -> vector<4x32xf32>
    %cst_44 = arith.constant dense<0.000000e+00> : vector<4x32xf32>
    %94 = tpu.matmul %90, %81, %cst_44 {dimension_numbers = #tpu.dot_dimension_numbers<[1], [0], [0], [1], [0, 0, 1, 1], [], []>} : vector<4x16xf32>, vector<16x32xf32>, vector<4x32xf32> -> vector<4x32xf32>
    %cst_45 = arith.constant dense<0.000000e+00> : vector<4x4xf32>
    %95 = tpu.matmul %92, %82, %cst_45 {dimension_numbers = #tpu.dot_dimension_numbers<[1], [0], [0], [1], [0, 0, 1, 1], [], []>} : vector<4x16xf32>, vector<16x4xf32>, vector<4x4xf32> -> vector<4x4xf32>
    %96 = vector.broadcast %4 : vector<4x1xf32> to vector<4x4xf32>
    %97 = arith.addf %95, %96 : vector<4x4xf32>
    %98 = tpu.concatenate %93, %94, %97 in 1 : vector<4x32xf32>, vector<4x32xf32>, vector<4x4xf32> -> vector<4x68xf32>
    %99 = tpu.concatenate %84, %86 in 1 : vector<4x16xf32>, vector<4x16xf32> -> vector<4x32xf32>
    %100 = tpu.concatenate %77, %78 in 0 : vector<16x256xf32>, vector<16x256xf32> -> vector<32x256xf32>
    %cst_46 = arith.constant dense<0.000000e+00> : vector<4x256xf32>
    %101 = tpu.matmul %99, %100, %cst_46 {dimension_numbers = #tpu.dot_dimension_numbers<[1], [0], [0], [1], [0, 0, 1, 1], [], []>} : vector<4x32xf32>, vector<32x256xf32>, vector<4x256xf32> -> vector<4x256xf32>
    %cst_47 = arith.constant dense<0.000000e+00> : vector<4x256xf32>
    %102 = tpu.matmul %98, %1, %cst_47 {dimension_numbers = #tpu.dot_dimension_numbers<[1], [0], [0], [1], [0, 0, 1, 1], [], []>} : vector<4x68xf32>, vector<68x256xf32>, vector<4x256xf32> -> vector<4x256xf32>
    %103 = arith.addf %101, %102 : vector<4x256xf32>
    %cst_48 = arith.constant dense<0.000000e+00> : vector<16x32xf32>
    %104 = tpu.matmul %77, %2, %cst_48 {dimension_numbers = #tpu.dot_dimension_numbers<[1], [0], [0], [1], [0, 0, 1, 1], [], []>} : vector<16x256xf32>, vector<256x32xf32>, vector<16x32xf32> -> vector<16x32xf32>
    %105 = tpu.concatenate %104, %80, %81 in 0 : vector<16x32xf32>, vector<16x32xf32>, vector<16x32xf32> -> vector<48x32xf32>
    %106 = vector.extract_strided_slice %5 {offsets = [0, 0, 0], sizes = [1, 3, 16], strides = [1, 1, 1]} : vector<3x3x16xf32> to vector<1x3x16xf32>
    %107 = vector.shape_cast %106 : vector<1x3x16xf32> to vector<3x16xf32>
    %108 = vector.extract_strided_slice %5 {offsets = [1, 0, 0], sizes = [1, 3, 16], strides = [1, 1, 1]} : vector<3x3x16xf32> to vector<1x3x16xf32>
    %109 = vector.shape_cast %108 : vector<1x3x16xf32> to vector<3x16xf32>
    %110 = vector.extract_strided_slice %5 {offsets = [2, 0, 0], sizes = [1, 3, 16], strides = [1, 1, 1]} : vector<3x3x16xf32> to vector<1x3x16xf32>
    %111 = vector.shape_cast %110 : vector<1x3x16xf32> to vector<3x16xf32>
    %112 = tpu.concatenate %107, %109, %111 in 1 : vector<3x16xf32>, vector<3x16xf32>, vector<3x16xf32> -> vector<3x48xf32>
    %cst_49 = arith.constant dense<0.000000e+00> : vector<3x32xf32>
    %113 = tpu.matmul %112, %105, %cst_49 {dimension_numbers = #tpu.dot_dimension_numbers<[1], [0], [0], [1], [0, 0, 1, 1], [], []>} : vector<3x48xf32>, vector<48x32xf32>, vector<3x32xf32> -> vector<3x32xf32>
    %114 = vector.broadcast %6 : vector<3x1xf32> to vector<3x32xf32>
    %115 = arith.addf %113, %114 : vector<3x32xf32>
    %c0_50 = arith.constant 0 : index
    %c0_51 = arith.constant 0 : index
    %116 = vector.load %arg14[%c0_50, %c0_51] : memref<4x256xf32, #tpu.memory_space<vmem>>, vector<4x256xf32>
    tpu.vector_store %arg14[%c0_50, %c0_51], %103 {strides = array<i32>} : memref<4x256xf32, #tpu.memory_space<vmem>>, vector<4x256xf32>,
    %117 = vector.extract_strided_slice %1 {offsets = [0, 0], sizes = [32, 256], strides = [1, 1]} : vector<68x256xf32> to vector<32x256xf32>
    %cst_52 = arith.constant dense<0.000000e+00> : vector<3x256xf32>
    %118 = tpu.matmul %115, %117, %cst_52 {dimension_numbers = #tpu.dot_dimension_numbers<[1], [0], [0], [1], [0, 0, 1, 1], [], []>} : vector<3x32xf32>, vector<32x256xf32>, vector<3x256xf32> -> vector<3x256xf32>
    %c0_53 = arith.constant 0 : index
    %c0_54 = arith.constant 0 : index
    %119 = vector.load %arg15[%c0_53, %c0_54] : memref<3x256xf32, #tpu.memory_space<vmem>>, vector<3x256xf32>
    tpu.vector_store %arg15[%c0_53, %c0_54], %118 {strides = array<i32>} : memref<3x256xf32, #tpu.memory_space<vmem>>, vector<3x256xf32>,
    return
  }
  func.func @transform_0(%arg0: i32) -> (i32, i32) {
    %c0_i32 = arith.constant 0 : i32
    %c0_i32_0 = arith.constant 0 : i32
    return %c0_i32, %arg0 : i32, i32
  }
  func.func @transform_1(%arg0: i32) -> (i32, i32) {
    %c0_i32 = arith.constant 0 : i32
    %c0_i32_0 = arith.constant 0 : i32
    return %c0_i32, %arg0 : i32, i32
  }
  func.func @transform_2(%arg0: i32) -> (i32, i32) {
    %c0_i32 = arith.constant 0 : i32
    %c0_i32_0 = arith.constant 0 : i32
    %c0_i32_1 = arith.constant 0 : i32
    return %c0_i32, %c0_i32_0 : i32, i32
  }
  func.func @transform_3(%arg0: i32) -> (i32, i32) {
    %c0_i32 = arith.constant 0 : i32
    %c0_i32_0 = arith.constant 0 : i32
    %c0_i32_1 = arith.constant 0 : i32
    return %c0_i32, %c0_i32_0 : i32, i32
  }
  func.func @transform_4(%arg0: i32) -> (i32, i32) {
    %c0_i32 = arith.constant 0 : i32
    %c0_i32_0 = arith.constant 0 : i32
    %c0_i32_1 = arith.constant 0 : i32
    return %c0_i32, %c0_i32_0 : i32, i32
  }
  func.func @transform_5(%arg0: i32) -> (i32, i32, i32) {
    %c0_i32 = arith.constant 0 : i32
    %c0_i32_0 = arith.constant 0 : i32
    %c0_i32_1 = arith.constant 0 : i32
    %c0_i32_2 = arith.constant 0 : i32
    return %c0_i32, %c0_i32_0, %c0_i32_1 : i32, i32, i32
  }
  func.func @transform_6(%arg0: i32) -> (i32, i32) {
    %c0_i32 = arith.constant 0 : i32
    %c0_i32_0 = arith.constant 0 : i32
    %c0_i32_1 = arith.constant 0 : i32
    return %c0_i32, %c0_i32_0 : i32, i32
  }
  func.func @transform_7(%arg0: i32) -> (i32, i32, i32) {
    %c0_i32 = arith.constant 0 : i32
    %c0_i32_0 = arith.constant 0 : i32
    %c0_i32_1 = arith.constant 0 : i32
    %c0_i32_2 = arith.constant 0 : i32
    return %c0_i32, %c0_i32_0, %c0_i32_1 : i32, i32, i32
  }
  func.func @transform_8(%arg0: i32) -> (i32, i32) {
    %c0_i32 = arith.constant 0 : i32
    %c0_i32_0 = arith.constant 0 : i32
    %c0_i32_1 = arith.constant 0 : i32
    return %c0_i32, %c0_i32_0 : i32, i32
  }
  func.func @transform_9(%arg0: i32) -> (i32, i32, i32) {
    %c0_i32 = arith.constant 0 : i32
    %c0_i32_0 = arith.constant 0 : i32
    %c0_i32_1 = arith.constant 0 : i32
    %c0_i32_2 = arith.constant 0 : i32
    return %c0_i32, %c0_i32_0, %c0_i32_1 : i32, i32, i32
  }
  func.func @transform_10(%arg0: i32) -> (i32, i32) {
    %c0_i32 = arith.constant 0 : i32
    %c0_i32_0 = arith.constant 0 : i32
    %c0_i32_1 = arith.constant 0 : i32
    return %c0_i32, %c0_i32_0 : i32, i32
  }
  func.func @transform_11(%arg0: i32) -> (i32, i32, i32) {
    %c0_i32 = arith.constant 0 : i32
    %c0_i32_0 = arith.constant 0 : i32
    %c0_i32_1 = arith.constant 0 : i32
    %c0_i32_2 = arith.constant 0 : i32
    return %c0_i32, %c0_i32_0, %c0_i32_1 : i32, i32, i32
  }
  func.func @transform_12(%arg0: i32) -> (i32, i32) {
    %c0_i32 = arith.constant 0 : i32
    %c0_i32_0 = arith.constant 0 : i32
    %c0_i32_1 = arith.constant 0 : i32
    return %c0_i32, %c0_i32_0 : i32, i32
  }
  func.func @transform_13(%arg0: i32) -> (i32, i32) {
    %c0_i32 = arith.constant 0 : i32
    %c0_i32_0 = arith.constant 0 : i32
    return %c0_i32, %arg0 : i32, i32
  }
  func.func @transform_14(%arg0: i32) -> (i32, i32) {
    %c0_i32 = arith.constant 0 : i32
    %c0_i32_0 = arith.constant 0 : i32
    return %c0_i32, %arg0 : i32, i32
  }
}

</mosaic_0001>

<llo_original>
// kernel: tpu_custom_call.1
$region0: #{tpu_custom_call.1}
  #allocation0 [shape = 'u32[]', space=smem, size = 0x4, offset = 0x4, fixed_abs, tag = 'smem constant byte address 0x4 - core index']
  #allocation1 [shape = 'u32[72,128]{1,0:T(1,128)}', space=vmem, size = 0x9000, scoped, tag = 'internal scratch']
  %s0 = inlined_call_operand.vmem [shape: f32[4,256], index: 0, kind: input, shape index: {}]
  %s1 = inlined_call_operand.vmem [shape: f32[4,256], index: 1, kind: input, shape index: {}]
  %s2 = inlined_call_operand.vmem [shape: f32[256,68], index: 2, kind: input, shape index: {}]
  %s3 = inlined_call_operand.vmem [shape: f32[68,256], index: 3, kind: input, shape index: {}]
  %s4 = inlined_call_operand.vmem [shape: f32[256,32], index: 4, kind: input, shape index: {}]
  %s5 = inlined_call_operand.vmem [shape: f32[5,8,4], index: 5, kind: input, shape index: {}]
  %s6 = inlined_call_operand.vmem [shape: f32[8,1], index: 6, kind: input, shape index: {}]
  %s7 = inlined_call_operand.vmem [shape: f32[5,16,8], index: 7, kind: input, shape index: {}]
  %s8 = inlined_call_operand.vmem [shape: f32[16,1], index: 8, kind: input, shape index: {}]
  %s9 = inlined_call_operand.vmem [shape: f32[5,4,16], index: 9, kind: input, shape index: {}]
  %s10 = inlined_call_operand.vmem [shape: f32[4,1], index: 10, kind: input, shape index: {}]
  %s11 = inlined_call_operand.vmem [shape: f32[3,3,16], index: 11, kind: input, shape index: {}]
  %s12 = inlined_call_operand.vmem [shape: f32[3,1], index: 12, kind: input, shape index: {}]
  %s13 = inlined_call_operand.hbm [shape: f32[4,256], index: 13, kind: output, shape index: {0}]
  %s14 = inlined_call_operand.hbm [shape: f32[3,256], index: 14, kind: output, shape index: {1}]
  %15 = xla_tuple %s13, %s14
  %s16 = sld [smem:[#allocation0]]
  $region70: #{tpu_custom_call.1} parent=0
    _
  %s18 = ssub.s32 1, %s16
  %s19 = scalar_select 0, %s18, %s16
  $region1: #{tpu_custom_call.1} parent=0
    #allocation2 [shape = 'u8[4096]{0}', space=vmem, size = 0x1000, scoped, tag = 'output window, operand 0, single buffered']
    #allocation3 [shape = 's32[1]{0}', space=sflag, size = 0x4, scoped, tag = 'scoped memory for tpu_custom_call.1']
    #allocation4 [shape = 'u8[4096]{0}', space=vmem, size = 0x1000, scoped, tag = 'output window, operand 1, single buffered']
    #allocation5 [shape = 's32[1]{0}', space=sflag, size = 0x4, scoped, tag = 'scoped memory for tpu_custom_call.1']
    %20 = vsyncpa [#allocation3], 0
    %21 = vsyncpa [#allocation5], 0
    // Predicated region
    $region2: #{tpu_custom_call.1} parent=1 // pred_check
      _
    $region3: #{tpu_custom_call.1} parent=1 // pred_check_branch
      %23 = sbr.rel (0) target = $region5
    $region4: #{tpu_custom_call.1} parent=1 // pred_region
      _
    $region5: #{tpu_custom_call.1} parent=1 // pred_fallthru
      _
    // Predicated region
    $region6: #{tpu_custom_call.1} parent=1 // pred_check
      _
    $region7: #{tpu_custom_call.1} parent=1 // pred_check_branch
      %25 = sbr.rel (0) target = $region9
    $region8: #{tpu_custom_call.1} parent=1 // pred_region
      _
    $region9: #{tpu_custom_call.1} parent=1 // pred_fallthru
      _
    // Predicated region
    $region10: #{tpu_custom_call.1} parent=1 // pred_check
      _
    $region11: #{tpu_custom_call.1} parent=1 // pred_check_branch
      %27 = sbr.rel (0) target = $region13
    $region12: #{tpu_custom_call.1} parent=1 // pred_region
      _
    $region13: #{tpu_custom_call.1} parent=1 // pred_fallthru
      _
    // Predicated region
    $region14: #{tpu_custom_call.1} parent=1 // pred_check
      _
    $region15: #{tpu_custom_call.1} parent=1 // pred_check_branch
      %29 = sbr.rel (0) target = $region17
    $region16: #{tpu_custom_call.1} parent=1 // pred_region
      _
    $region17: #{tpu_custom_call.1} parent=1 // pred_fallthru
      _
    // Predicated region
    $region18: #{tpu_custom_call.1} parent=1 // pred_check
      _
    $region19: #{tpu_custom_call.1} parent=1 // pred_check_branch
      %31 = sbr.rel (0) target = $region21
    $region20: #{tpu_custom_call.1} parent=1 // pred_region
      _
    $region21: #{tpu_custom_call.1} parent=1 // pred_fallthru
      _
    // Predicated region
    $region22: #{tpu_custom_call.1} parent=1 // pred_check
      _
    $region23: #{tpu_custom_call.1} parent=1 // pred_check_branch
      %33 = sbr.rel (0) target = $region25
    $region24: #{tpu_custom_call.1} parent=1 // pred_region
      _
    $region25: #{tpu_custom_call.1} parent=1 // pred_fallthru
      _
    // Predicated region
    $region26: #{tpu_custom_call.1} parent=1 // pred_check
      _
    $region27: #{tpu_custom_call.1} parent=1 // pred_check_branch
      %35 = sbr.rel (0) target = $region29
    $region28: #{tpu_custom_call.1} parent=1 // pred_region
      _
    $region29: #{tpu_custom_call.1} parent=1 // pred_fallthru
      _
    // Predicated region
    $region30: #{tpu_custom_call.1} parent=1 // pred_check
      _
    $region31: #{tpu_custom_call.1} parent=1 // pred_check_branch
      %37 = sbr.rel (0) target = $region33
    $region32: #{tpu_custom_call.1} parent=1 // pred_region
      _
    $region33: #{tpu_custom_call.1} parent=1 // pred_fallthru
      _
    // Predicated region
    $region34: #{tpu_custom_call.1} parent=1 // pred_check
      _
    $region35: #{tpu_custom_call.1} parent=1 // pred_check_branch
      %39 = sbr.rel (0) target = $region37
    $region36: #{tpu_custom_call.1} parent=1 // pred_region
      _
    $region37: #{tpu_custom_call.1} parent=1 // pred_fallthru
      _
    // Predicated region
    $region38: #{tpu_custom_call.1} parent=1 // pred_check
      _
    $region39: #{tpu_custom_call.1} parent=1 // pred_check_branch
      %41 = sbr.rel (0) target = $region41
    $region40: #{tpu_custom_call.1} parent=1 // pred_region
      _
    $region41: #{tpu_custom_call.1} parent=1 // pred_fallthru
      _
    // Predicated region
    $region42: #{tpu_custom_call.1} parent=1 // pred_check
      _
    $region43: #{tpu_custom_call.1} parent=1 // pred_check_branch
      %43 = sbr.rel (0) target = $region45
    $region44: #{tpu_custom_call.1} parent=1 // pred_region
      _
    $region45: #{tpu_custom_call.1} parent=1 // pred_fallthru
      _
    // Predicated region
    $region46: #{tpu_custom_call.1} parent=1 // pred_check
      _
    $region47: #{tpu_custom_call.1} parent=1 // pred_check_branch
      %45 = sbr.rel (0) target = $region49
    $region48: #{tpu_custom_call.1} parent=1 // pred_region
      _
    $region49: #{tpu_custom_call.1} parent=1 // pred_fallthru
      _
    // Predicated region
    $region50: #{tpu_custom_call.1} parent=1 // pred_check
      _
    $region51: #{tpu_custom_call.1} parent=1 // pred_check_branch
      %47 = sbr.rel (0) target = $region53
    $region52: #{tpu_custom_call.1} parent=1 // pred_region
      _
    $region53: #{tpu_custom_call.1} parent=1 // pred_fallthru
      _
    %v48 = vld [vmem:[%s2] sm:$0xff]
    %v49 = vld [vmem:[%s2 + $0x8] sm:$0xff]
    %v50 = vld [vmem:[%s2 + $0x10] sm:$0xff]
    %v51 = vld [vmem:[%s2 + $0x18] sm:$0xff]
    %v52 = vld [vmem:[%s2 + $0x20] sm:$0xff]
    %v53 = vld [vmem:[%s2 + $0x28] sm:$0xff]
    %v54 = vld [vmem:[%s2 + $0x30] sm:$0xff]
    %v55 = vld [vmem:[%s2 + $0x38] sm:$0xff]
    %v56 = vld [vmem:[%s2 + $0x40] sm:$0xff]
    %v57 = vld [vmem:[%s2 + $0x48] sm:$0xff]
    %v58 = vld [vmem:[%s2 + $0x50] sm:$0xff]
    %v59 = vld [vmem:[%s2 + $0x58] sm:$0xff]
    %v60 = vld [vmem:[%s2 + $0x60] sm:$0xff]
    %v61 = vld [vmem:[%s2 + $0x68] sm:$0xff]
    %v62 = vld [vmem:[%s2 + $0x70] sm:$0xff]
    %v63 = vld [vmem:[%s2 + $0x78] sm:$0xff]
    %v64 = vld [vmem:[%s2 + $0x80] sm:$0xff]
    %v65 = vld [vmem:[%s2 + $0x88] sm:$0xff]
    %v66 = vld [vmem:[%s2 + $0x90] sm:$0xff]
    %v67 = vld [vmem:[%s2 + $0x98] sm:$0xff]
    %v68 = vld [vmem:[%s2 + $0xa0] sm:$0xff]
    %v69 = vld [vmem:[%s2 + $0xa8] sm:$0xff]
    %v70 = vld [vmem:[%s2 + $0xb0] sm:$0xff]
    %v71 = vld [vmem:[%s2 + $0xb8] sm:$0xff]
    %v72 = vld [vmem:[%s2 + $0xc0] sm:$0xff]
    %v73 = vld [vmem:[%s2 + $0xc8] sm:$0xff]
    %v74 = vld [vmem:[%s2 + $0xd0] sm:$0xff]
    %v75 = vld [vmem:[%s2 + $0xd8] sm:$0xff]
    %v76 = vld [vmem:[%s2 + $0xe0] sm:$0xff]
    %v77 = vld [vmem:[%s2 + $0xe8] sm:$0xff]
    %v78 = vld [vmem:[%s2 + $0xf0] sm:$0xff]
    %v79 = vld [vmem:[%s2 + $0xf8] sm:$0xff]
    %v80 = vld [vmem:[%s3] sm:$0xff]
    %v81 = vld [vmem:[%s3 + $0x8] sm:$0xff]
    %v82 = vld [vmem:[%s3 + $0x10] sm:$0xff]
    %v83 = vld [vmem:[%s3 + $0x18] sm:$0xff]
    %v84 = vld [vmem:[%s3 + $0x20] sm:$0xff]
    %v85 = vld [vmem:[%s3 + $0x28] sm:$0xff]
    %v86 = vld [vmem:[%s3 + $0x30] sm:$0xff]
    %v87 = vld [vmem:[%s3 + $0x38] sm:$0xff]
    %v88 = vld [vmem:[%s3 + $0x40] sm:$0xff]
    %v89 = vld [vmem:[%s3 + $0x48] sm:$0xff]
    %v90 = vld [vmem:[%s3 + $0x50] sm:$0xff]
    %v91 = vld [vmem:[%s3 + $0x58] sm:$0xff]
    %v92 = vld [vmem:[%s3 + $0x60] sm:$0xff]
    %v93 = vld [vmem:[%s3 + $0x68] sm:$0xff]
    %v94 = vld [vmem:[%s3 + $0x70] sm:$0xff]
    %v95 = vld [vmem:[%s3 + $0x78] sm:$0xff]
    %v96 = vld [vmem:[%s3 + $0x80] sm:$0xf]
    %v97 = vld [vmem:[%s3 + $0x88] sm:$0xf]
    %v98 = vld [vmem:[%s4] sm:$0xff]
    %v99 = vld [vmem:[%s4 + $0x8] sm:$0xff]
    %v100 = vld [vmem:[%s4 + $0x10] sm:$0xff]
    %v101 = vld [vmem:[%s4 + $0x18] sm:$0xff]
    %v102 = vld [vmem:[%s4 + $0x20] sm:$0xff]
    %v103 = vld [vmem:[%s4 + $0x28] sm:$0xff]
    %v104 = vld [vmem:[%s4 + $0x30] sm:$0xff]
    %v105 = vld [vmem:[%s4 + $0x38] sm:$0xff]
    %v106 = vld [vmem:[%s4 + $0x40] sm:$0xff]
    %v107 = vld [vmem:[%s4 + $0x48] sm:$0xff]
    %v108 = vld [vmem:[%s4 + $0x50] sm:$0xff]
    %v109 = vld [vmem:[%s4 + $0x58] sm:$0xff]
    %v110 = vld [vmem:[%s4 + $0x60] sm:$0xff]
    %v111 = vld [vmem:[%s4 + $0x68] sm:$0xff]
    %v112 = vld [vmem:[%s4 + $0x70] sm:$0xff]
    %v113 = vld [vmem:[%s4 + $0x78] sm:$0xff]
    %v114 = vld [vmem:[%s4 + $0x80] sm:$0xff]
    %v115 = vld [vmem:[%s4 + $0x88] sm:$0xff]
    %v116 = vld [vmem:[%s4 + $0x90] sm:$0xff]
    %v117 = vld [vmem:[%s4 + $0x98] sm:$0xff]
    %v118 = vld [vmem:[%s4 + $0xa0] sm:$0xff]
    %v119 = vld [vmem:[%s4 + $0xa8] sm:$0xff]
    %v120 = vld [vmem:[%s4 + $0xb0] sm:$0xff]
    %v121 = vld [vmem:[%s4 + $0xb8] sm:$0xff]
    %v122 = vld [vmem:[%s4 + $0xc0] sm:$0xff]
    %v123 = vld [vmem:[%s4 + $0xc8] sm:$0xff]
    %v124 = vld [vmem:[%s4 + $0xd0] sm:$0xff]
    %v125 = vld [vmem:[%s4 + $0xd8] sm:$0xff]
    %v126 = vld [vmem:[%s4 + $0xe0] sm:$0xff]
    %v127 = vld [vmem:[%s4 + $0xe8] sm:$0xff]
    %v128 = vld [vmem:[%s4 + $0xf0] sm:$0xff]
    %v129 = vld [vmem:[%s4 + $0xf8] sm:$0xff]
    %v130 = vld [vmem:[%s9] sm:$0xf]
    %v131 = vld [vmem:[%s9 + $0x4] sm:$0xf]
    %v132 = vld [vmem:[%s9 + $0x8] sm:$0xf]
    %v133 = vld [vmem:[%s9 + $0xc] sm:$0xf]
    %v134 = vld [vmem:[%s9 + $0x10] sm:$0xf]
    %v135 = vld [vmem:[%s10] sm:$0xf]
    %v136 = vld [vmem:[%s11] sm:$0x7]
    %v137 = vld [vmem:[%s11 + $0x4] sm:$0x7]
    %v138 = vld [vmem:[%s11 + $0x8] sm:$0x7]
    %v139 = vld [vmem:[%s12] sm:$0x7]
    %v140 = vld [vmem:[%s0] sm:$0xff]
    %v141 = vld [vmem:[%s1] sm:$0xff]
    %143 = vst [vmem:[#allocation1] ss:$2 sm:$0xff] %v140
    %v144 = vld.sshfl [vmem:[#allocation1] sm:$0xff pattern:$0x75316420]
    %v145 = vld.sshfl [vmem:[#allocation1 + $0x8] sm:$0xff pattern:$0x75316420]
    %148 = vmatpush.msra.mxu0 %v63
    %149 = vmatpush.msra.mxu0 %v62
    %150 = vmatpush.msra.mxu0 %v61
    %151 = vmatpush.msra.mxu0 %v60
    %152 = vmatpush.msra.mxu0 %v59
    %153 = vmatpush.msra.mxu0 %v58
    %154 = vmatpush.msra.mxu0 %v57
    %155 = vmatpush.msra.mxu0 %v56
    %156 = vmatpush.msra.mxu0 %v55
    %157 = vmatpush.msra.mxu0 %v54
    %158 = vmatpush.msra.mxu0 %v53
    %159 = vmatpush.msra.mxu0 %v52
    %160 = vmatpush.msra.mxu0 %v51
    %161 = vmatpush.msra.mxu0 %v50
    %162 = vmatpush.msra.mxu0 %v49
    %163 = vmatpush.msra.mxu0 %v48
    %164 = vmatmul.f32.gmra.mxu0 %v144
    %v165 = vpop.f32.mrf.mxu0
    %v166 = vadd.f32 0.0, %v165
    %167 = vdwg.mxu0
    %168 = vmatpush.msra.mxu0 %v79
    %169 = vmatpush.msra.mxu0 %v78
    %170 = vmatpush.msra.mxu0 %v77
    %171 = vmatpush.msra.mxu0 %v76
    %172 = vmatpush.msra.mxu0 %v75
    %173 = vmatpush.msra.mxu0 %v74
    %174 = vmatpush.msra.mxu0 %v73
    %175 = vmatpush.msra.mxu0 %v72
    %176 = vmatpush.msra.mxu0 %v71
    %177 = vmatpush.msra.mxu0 %v70
    %178 = vmatpush.msra.mxu0 %v69
    %179 = vmatpush.msra.mxu0 %v68
    %180 = vmatpush.msra.mxu0 %v67
    %181 = vmatpush.msra.mxu0 %v66
    %182 = vmatpush.msra.mxu0 %v65
    %183 = vmatpush.msra.mxu0 %v64
    %184 = vmatmul.f32.gmra.mxu0 %v145
    %v185 = vpop.f32.mrf.mxu0
    %v186 = vadd.f32 %v166, %v185
    %187 = vdwg.mxu0
    %v188 = vld [vmem:[%s5] sm:$0xff]
    %v189 = vld [vmem:[%s5 + $0x8] sm:$0xff]
    %v190 = vld [vmem:[%s5 + $0x10] sm:$0xff]
    %v191 = vld [vmem:[%s5 + $0x18] sm:$0xff]
    %v192 = vld [vmem:[%s5 + $0x20] sm:$0xff]
    %v193 = vld [vmem:[%s6] sm:$0xff]
    %vm194 = vcmask 31744
    %v196 = vsel %vm194, %v190, 0
    %vm198 = vcmask 1043456
    %v200 = vsel %vm198, %v186, 0
    %202 = vmatpush.msra.mxu0 0.0
    %203 = vmatpush.msra.mxu0 0.0
    %204 = vmatpush.msra.mxu0 0.0
    %205 = vmatpush.msra.mxu0 0.0
    %206 = vmatpush.msra.mxu0 0.0
    %207 = vmatpush.msra.mxu0 0.0
    %208 = vmatpush.msra.mxu0 0.0
    %209 = vmatpush.msra.mxu0 0.0
    %210 = vmatpush.msra.mxu0 0.0
    %211 = vmatpush.msra.mxu0 0.0
    %212 = vmatpush.msra.mxu0 0.0
    %213 = vmatpush.msra.mxu0 0.0
    %214 = vmatpush.msra.mxu0 0.0
    %215 = vmatpush.msra.mxu0 0.0
    %216 = vmatpush.msra.mxu0 0.0
    %217 = vmatpush.msra.mxu0 %v200
    %218 = vmatmul.f32.gmra.mxu0 %v196
    %v219 = vpop.f32.mrf.mxu0
    %v220 = vadd.f32 0.0, %v219
    %221 = vdwg.mxu0
    %222 = vrot.lane.b32.xlu0 %v186, 96
    %v223 = vpop.permute.xlu0 %222
    %v225 = vsel %vm194, %v191, 0
    %v227 = vsel %vm198, %v223, 0
    %229 = vmatpush.msra.mxu0 0.0
    %230 = vmatpush.msra.mxu0 0.0
    %231 = vmatpush.msra.mxu0 0.0
    %232 = vmatpush.msra.mxu0 0.0
    %233 = vmatpush.msra.mxu0 0.0
    %234 = vmatpush.msra.mxu0 0.0
    %235 = vmatpush.msra.mxu0 0.0
    %236 = vmatpush.msra.mxu0 0.0
    %237 = vmatpush.msra.mxu0 0.0
    %238 = vmatpush.msra.mxu0 0.0
    %239 = vmatpush.msra.mxu0 0.0
    %240 = vmatpush.msra.mxu0 0.0
    %241 = vmatpush.msra.mxu0 0.0
    %242 = vmatpush.msra.mxu0 0.0
    %243 = vmatpush.msra.mxu0 0.0
    %244 = vmatpush.msra.mxu0 %v227
    %245 = vmatmul.f32.gmra.mxu0 %v225
    %v246 = vpop.f32.mrf.mxu0
    %v247 = vadd.f32 0.0, %v246
    %248 = vdwg.mxu0
    %250 = vset.pattern.permute.xlu0 0
    %251 = vperm.xlu0 %250, %v193
    %v252 = vpop.permute.xlu0 %251
    %254 = vrot.lane.b32.xlu0 %v186, 64
    %v255 = vpop.permute.xlu0 %254
    %v257 = vsel %vm194, %v192, 0
    %v259 = vsel %vm198, %v255, 0
    %261 = vmatpush.msra.mxu0 0.0
    %262 = vmatpush.msra.mxu0 0.0
    %263 = vmatpush.msra.mxu0 0.0
    %264 = vmatpush.msra.mxu0 0.0
    %265 = vmatpush.msra.mxu0 0.0
    %266 = vmatpush.msra.mxu0 0.0
    %267 = vmatpush.msra.mxu0 0.0
    %268 = vmatpush.msra.mxu0 0.0
    %269 = vmatpush.msra.mxu0 0.0
    %270 = vmatpush.msra.mxu0 0.0
    %271 = vmatpush.msra.mxu0 0.0
    %272 = vmatpush.msra.mxu0 0.0
    %273 = vmatpush.msra.mxu0 0.0
    %274 = vmatpush.msra.mxu0 0.0
    %275 = vmatpush.msra.mxu0 0.0
    %276 = vmatpush.msra.mxu0 %v259
    %277 = vmatmul.f32.gmra.mxu0 %v257
    %v278 = vpop.f32.mrf.mxu0
    %v279 = vadd.f32 %v252, %v278
    %280 = vdwg.mxu0
    %282 = vrot.lane.b32.xlu0 %v247, 32
    %v283 = vpop.permute.xlu0 %282
    %286 = vrot.lane.b32.xlu0 %v279, 64
    %v287 = vpop.permute.xlu0 %286
    %vm289 = vcmask 261120
    %v290 = vsel %vm289, %v220, %v283
    %vm291 = vcmask 523264
    %v292 = vsel %vm291, %v290, %v287
    %294 = vrot.lane.b32.xlu0 %v220, 32
    %v295 = vpop.permute.xlu0 %294
    %v297 = vsel %vm289, %v247, %v295
    %v298 = vsel %vm291, %v297, %v287
    %300 = vrot.lane.b32.xlu0 %v189, 4
    %v301 = vpop.permute.xlu0 %300
    %v303 = vsel %vm194, %v188, %v301
    %305 = vrot.lane.b32.xlu0 %v188, 4
    %v306 = vpop.permute.xlu0 %305
    %v308 = vsel %vm194, %v189, %v306
    %309 = vst [vmem:[#allocation1] ss:$2 sm:$0xff] %v140
    %v310 = vld.sshfl [vmem:[#allocation1] sm:$0xff pattern:$0x75316420]
    %v311 = vld.sshfl [vmem:[#allocation1 + $0x8] sm:$0xff pattern:$0x75316420]
    %s315 = scalar_lea.vmem [#allocation1], 1
    %316 = vst [vmem:[%s315] ss:$2 sm:$0xff] %v141
    %v317 = vld.sshfl [vmem:[#allocation1] sm:$0xff pattern:$0x75316420]
    %v318 = vld.sshfl [vmem:[#allocation1 + $0x8] sm:$0xff pattern:$0x75316420]
    %v321 = vsel %vm198, %v310, %v317
    %v322 = vsel %vm198, %v311, %v318
    %vm323 = vcmask 556032
    %v325 = vsel %vm323, %v292, 0
    %v328 = vsel %vm323, %v298, 0
    %v331 = vsel %vm198, %v96, 0
    %v334 = vsel %vm198, %v97, 0
    %336 = vmatpush.msra.mxu0 0.0
    %337 = vmatpush.msra.mxu0 0.0
    %338 = vmatpush.msra.mxu0 0.0
    %339 = vmatpush.msra.mxu0 0.0
    %340 = vmatpush.msra.mxu0 0.0
    %341 = vmatpush.msra.mxu0 0.0
    %342 = vmatpush.msra.mxu0 0.0
    %343 = vmatpush.msra.mxu0 %v331
    %344 = vmatpush.msra.mxu0 %v94
    %345 = vmatpush.msra.mxu0 %v92
    %346 = vmatpush.msra.mxu0 %v90
    %347 = vmatpush.msra.mxu0 %v88
    %348 = vmatpush.msra.mxu0 %v86
    %349 = vmatpush.msra.mxu0 %v84
    %350 = vmatpush.msra.mxu0 %v82
    %351 = vmatpush.msra.mxu0 %v80
    %352 = vmatmul.f32.gmra.mxu0 %v325
    %v353 = vpop.f32.mrf.mxu0
    %v354 = vadd.f32 0.0, %v353
    %355 = vmatmul.f32.gmra.mxu0 %v328
    %v356 = vpop.f32.mrf.mxu0
    %v357 = vadd.f32 0.0, %v356
    %358 = vdwg.mxu0
    %359 = vmatpush.msra.mxu0 0.0
    %360 = vmatpush.msra.mxu0 0.0
    %361 = vmatpush.msra.mxu0 0.0
    %362 = vmatpush.msra.mxu0 0.0
    %363 = vmatpush.msra.mxu0 0.0
    %364 = vmatpush.msra.mxu0 0.0
    %365 = vmatpush.msra.mxu0 0.0
    %366 = vmatpush.msra.mxu0 %v334
    %367 = vmatpush.msra.mxu0 %v95
    %368 = vmatpush.msra.mxu0 %v93
    %369 = vmatpush.msra.mxu0 %v91
    %370 = vmatpush.msra.mxu0 %v89
    %371 = vmatpush.msra.mxu0 %v87
    %372 = vmatpush.msra.mxu0 %v85
    %373 = vmatpush.msra.mxu0 %v83
    %374 = vmatpush.msra.mxu0 %v81
    %375 = vmatmul.f32.gmra.mxu0 %v325
    %v376 = vpop.f32.mrf.mxu0
    %v377 = vadd.f32 0.0, %v376
    %378 = vmatmul.f32.gmra.mxu0 %v328
    %v379 = vpop.f32.mrf.mxu0
    %v380 = vadd.f32 0.0, %v379
    %381 = vdwg.mxu0
    %vm382 = vcmask 64512
    %v384 = vsel %vm382, %v303, 0
    %v387 = vsel %vm382, %v308, 0
    %389 = vmatpush.msra.mxu0 0.0
    %390 = vmatpush.msra.mxu0 0.0
    %391 = vmatpush.msra.mxu0 0.0
    %392 = vmatpush.msra.mxu0 0.0
    %393 = vmatpush.msra.mxu0 0.0
    %394 = vmatpush.msra.mxu0 0.0
    %395 = vmatpush.msra.mxu0 0.0
    %396 = vmatpush.msra.mxu0 0.0
    %397 = vmatpush.msra.mxu0 0.0
    %398 = vmatpush.msra.mxu0 0.0
    %399 = vmatpush.msra.mxu0 0.0
    %400 = vmatpush.msra.mxu0 0.0
    %401 = vmatpush.msra.mxu0 0.0
    %402 = vmatpush.msra.mxu0 0.0
    %403 = vmatpush.msra.mxu0 0.0
    %404 = vmatpush.msra.mxu0 %v321
    %405 = vmatmul.f32.gmra.mxu0 %v384
    %v406 = vpop.f32.mrf.mxu0
    %v407 = vadd.f32 %v354, %v406
    %408 = vmatmul.f32.gmra.mxu0 %v387
    %v409 = vpop.f32.mrf.mxu0
    %v410 = vadd.f32 %v357, %v409
    %411 = vdwg.mxu0
    %412 = vmatpush.msra.mxu0 0.0
    %413 = vmatpush.msra.mxu0 0.0
    %414 = vmatpush.msra.mxu0 0.0
    %415 = vmatpush.msra.mxu0 0.0
    %416 = vmatpush.msra.mxu0 0.0
    %417 = vmatpush.msra.mxu0 0.0
    %418 = vmatpush.msra.mxu0 0.0
    %419 = vmatpush.msra.mxu0 0.0
    %420 = vmatpush.msra.mxu0 0.0
    %421 = vmatpush.msra.mxu0 0.0
    %422 = vmatpush.msra.mxu0 0.0
    %423 = vmatpush.msra.mxu0 0.0
    %424 = vmatpush.msra.mxu0 0.0
    %425 = vmatpush.msra.mxu0 0.0
    %426 = vmatpush.msra.mxu0 0.0
    %427 = vmatpush.msra.mxu0 %v322
    %428 = vmatmul.f32.gmra.mxu0 %v384
    %v429 = vpop.f32.mrf.mxu0
    %v430 = vadd.f32 %v377, %v429
    %431 = vmatmul.f32.gmra.mxu0 %v387
    %v432 = vpop.f32.mrf.mxu0
    %v433 = vadd.f32 %v380, %v432
    %434 = vdwg.mxu0
    %v435 = vmax.f32 %v407, 0.0
    %v436 = vmax.f32 %v430, 0.0
    %v437 = vmax.f32 %v410, 0.0
    %v438 = vmax.f32 %v433, 0.0
    %439 = vmatpush.msra.mxu0 %v63
    %440 = vmatpush.msra.mxu0 %v62
    %441 = vmatpush.msra.mxu0 %v61
    %442 = vmatpush.msra.mxu0 %v60
    %443 = vmatpush.msra.mxu0 %v59
    %444 = vmatpush.msra.mxu0 %v58
    %445 = vmatpush.msra.mxu0 %v57
    %446 = vmatpush.msra.mxu0 %v56
    %447 = vmatpush.msra.mxu0 %v55
    %448 = vmatpush.msra.mxu0 %v54
    %449 = vmatpush.msra.mxu0 %v53
    %450 = vmatpush.msra.mxu0 %v52
    %451 = vmatpush.msra.mxu0 %v51
    %452 = vmatpush.msra.mxu0 %v50
    %453 = vmatpush.msra.mxu0 %v49
    %454 = vmatpush.msra.mxu0 %v48
    %455 = vmatmul.f32.gmra.mxu0 %v435
    %v456 = vpop.f32.mrf.mxu0
    %v457 = vadd.f32 0.0, %v456
    %458 = vdwg.mxu0
    %459 = vmatpush.msra.mxu0 %v79
    %460 = vmatpush.msra.mxu0 %v78
    %461 = vmatpush.msra.mxu0 %v77
    %462 = vmatpush.msra.mxu0 %v76
    %463 = vmatpush.msra.mxu0 %v75
    %464 = vmatpush.msra.mxu0 %v74
    %465 = vmatpush.msra.mxu0 %v73
    %466 = vmatpush.msra.mxu0 %v72
    %467 = vmatpush.msra.mxu0 %v71
    %468 = vmatpush.msra.mxu0 %v70
    %469 = vmatpush.msra.mxu0 %v69
    %470 = vmatpush.msra.mxu0 %v68
    %471 = vmatpush.msra.mxu0 %v67
    %472 = vmatpush.msra.mxu0 %v66
    %473 = vmatpush.msra.mxu0 %v65
    %474 = vmatpush.msra.mxu0 %v64
    %475 = vmatmul.f32.gmra.mxu0 %v436
    %v476 = vpop.f32.mrf.mxu0
    %v477 = vadd.f32 %v457, %v476
    %478 = vdwg.mxu0
    %v479 = vld [vmem:[%s7] sm:$0xff]
    %v480 = vld [vmem:[%s7 + $0x8] sm:$0xff]
    %v481 = vld [vmem:[%s7 + $0x10] sm:$0xff]
    %v482 = vld [vmem:[%s7 + $0x18] sm:$0xff]
    %v483 = vld [vmem:[%s7 + $0x20] sm:$0xff]
    %v484 = vld [vmem:[%s7 + $0x28] sm:$0xff]
    %v485 = vld [vmem:[%s7 + $0x30] sm:$0xff]
    %v486 = vld [vmem:[%s7 + $0x38] sm:$0xff]
    %v487 = vld [vmem:[%s7 + $0x40] sm:$0xff]
    %v488 = vld [vmem:[%s7 + $0x48] sm:$0xff]
    %v489 = vld [vmem:[%s8] sm:$0xff]
    %v490 = vld [vmem:[%s8 + $0x8] sm:$0xff]
    %v492 = vsel %vm382, %v483, 0
    %v495 = vsel %vm382, %v484, 0
    %497 = vmatpush.msra.mxu0 0.0
    %498 = vmatpush.msra.mxu0 0.0
    %499 = vmatpush.msra.mxu0 0.0
    %500 = vmatpush.msra.mxu0 0.0
    %501 = vmatpush.msra.mxu0 0.0
    %502 = vmatpush.msra.mxu0 0.0
    %503 = vmatpush.msra.mxu0 0.0
    %504 = vmatpush.msra.mxu0 0.0
    %505 = vmatpush.msra.mxu0 0.0
    %506 = vmatpush.msra.mxu0 0.0
    %507 = vmatpush.msra.mxu0 0.0
    %508 = vmatpush.msra.mxu0 0.0
    %509 = vmatpush.msra.mxu0 0.0
    %510 = vmatpush.msra.mxu0 0.0
    %511 = vmatpush.msra.mxu0 0.0
    %512 = vmatpush.msra.mxu0 %v477
    %513 = vmatmul.f32.gmra.mxu0 %v492
    %v514 = vpop.f32.mrf.mxu0
    %v515 = vadd.f32 0.0, %v514
    %516 = vmatmul.f32.gmra.mxu0 %v495
    %v517 = vpop.f32.mrf.mxu0
    %v518 = vadd.f32 0.0, %v517
    %519 = vdwg.mxu0
    %521 = vrot.lane.b32.xlu0 %v477, 96
    %v522 = vpop.permute.xlu0 %521
    %v525 = vsel %vm382, %v485, 0
    %v528 = vsel %vm382, %v486, 0
    %530 = vmatpush.msra.mxu0 0.0
    %531 = vmatpush.msra.mxu0 0.0
    %532 = vmatpush.msra.mxu0 0.0
    %533 = vmatpush.msra.mxu0 0.0
    %534 = vmatpush.msra.mxu0 0.0
    %535 = vmatpush.msra.mxu0 0.0
    %536 = vmatpush.msra.mxu0 0.0
    %537 = vmatpush.msra.mxu0 0.0
    %538 = vmatpush.msra.mxu0 0.0
    %539 = vmatpush.msra.mxu0 0.0
    %540 = vmatpush.msra.mxu0 0.0
    %541 = vmatpush.msra.mxu0 0.0
    %542 = vmatpush.msra.mxu0 0.0
    %543 = vmatpush.msra.mxu0 0.0
    %544 = vmatpush.msra.mxu0 0.0
    %545 = vmatpush.msra.mxu0 %v522
    %546 = vmatmul.f32.gmra.mxu0 %v525
    %v547 = vpop.f32.mrf.mxu0
    %v548 = vadd.f32 0.0, %v547
    %549 = vmatmul.f32.gmra.mxu0 %v528
    %v550 = vpop.f32.mrf.mxu0
    %v551 = vadd.f32 0.0, %v550
    %552 = vdwg.mxu0
    %554 = vset.pattern.permute.xlu0 0
    %555 = vperm.xlu0 %554, %v489
    %v556 = vpop.permute.xlu0 %555
    %559 = vset.pattern.permute.xlu0 0
    %560 = vperm.xlu0 %559, %v490
    %v561 = vpop.permute.xlu0 %560
    %563 = vrot.lane.b32.xlu0 %v477, 64
    %v564 = vpop.permute.xlu0 %563
    %v567 = vsel %vm382, %v487, 0
    %v570 = vsel %vm382, %v488, 0
    %572 = vmatpush.msra.mxu0 0.0
    %573 = vmatpush.msra.mxu0 0.0
    %574 = vmatpush.msra.mxu0 0.0
    %575 = vmatpush.msra.mxu0 0.0
    %576 = vmatpush.msra.mxu0 0.0
    %577 = vmatpush.msra.mxu0 0.0
    %578 = vmatpush.msra.mxu0 0.0
    %579 = vmatpush.msra.mxu0 0.0
    %580 = vmatpush.msra.mxu0 0.0
    %581 = vmatpush.msra.mxu0 0.0
    %582 = vmatpush.msra.mxu0 0.0
    %583 = vmatpush.msra.mxu0 0.0
    %584 = vmatpush.msra.mxu0 0.0
    %585 = vmatpush.msra.mxu0 0.0
    %586 = vmatpush.msra.mxu0 0.0
    %587 = vmatpush.msra.mxu0 %v564
    %588 = vmatmul.f32.gmra.mxu0 %v567
    %v589 = vpop.f32.mrf.mxu0
    %v590 = vadd.f32 %v556, %v589
    %591 = vmatmul.f32.gmra.mxu0 %v570
    %v592 = vpop.f32.mrf.mxu0
    %v593 = vadd.f32 %v561, %v592
    %594 = vdwg.mxu0
    %597 = vrot.lane.b32.xlu0 %v548, 32
    %v598 = vpop.permute.xlu0 %597
    %599 = vrot.lane.b32.xlu0 %v551, 32
    %v600 = vpop.permute.xlu0 %599
    %605 = vrot.lane.b32.xlu0 %v590, 64
    %v606 = vpop.permute.xlu0 %605
    %607 = vrot.lane.b32.xlu0 %v593, 64
    %v608 = vpop.permute.xlu0 %607
    %v611 = vsel %vm289, %v515, %v598
    %v612 = vsel %vm289, %v518, %v600
    %v613 = vsel %vm291, %v611, %v606
    %v614 = vsel %vm291, %v612, %v608
    %617 = vrot.lane.b32.xlu0 %v515, 32
    %v618 = vpop.permute.xlu0 %617
    %619 = vrot.lane.b32.xlu0 %v518, 32
    %v620 = vpop.permute.xlu0 %619
    %v623 = vsel %vm289, %v548, %v618
    %v624 = vsel %vm289, %v551, %v620
    %v625 = vsel %vm291, %v623, %v606
    %v626 = vsel %vm291, %v624, %v608
    %629 = vrot.lane.b32.xlu0 %v481, 8
    %v630 = vpop.permute.xlu0 %629
    %631 = vrot.lane.b32.xlu0 %v482, 8
    %v632 = vpop.permute.xlu0 %631
    %v635 = vsel %vm382, %v479, %v630
    %v636 = vsel %vm382, %v480, %v632
    %639 = vrot.lane.b32.xlu0 %v479, 8
    %v640 = vpop.permute.xlu0 %639
    %641 = vrot.lane.b32.xlu0 %v480, 8
    %v642 = vpop.permute.xlu0 %641
    %v645 = vsel %vm382, %v481, %v640
    %v646 = vsel %vm382, %v482, %v642
    %v648 = vsel %vm323, %v613, 0
    %v651 = vsel %vm323, %v614, 0
    %v654 = vsel %vm323, %v625, 0
    %v657 = vsel %vm323, %v626, 0
    %659 = vmatpush.msra.mxu0 0.0
    %660 = vmatpush.msra.mxu0 0.0
    %661 = vmatpush.msra.mxu0 0.0
    %662 = vmatpush.msra.mxu0 0.0
    %663 = vmatpush.msra.mxu0 0.0
    %664 = vmatpush.msra.mxu0 0.0
    %665 = vmatpush.msra.mxu0 0.0
    %666 = vmatpush.msra.mxu0 %v331
    %667 = vmatpush.msra.mxu0 %v94
    %668 = vmatpush.msra.mxu0 %v92
    %669 = vmatpush.msra.mxu0 %v90
    %670 = vmatpush.msra.mxu0 %v88
    %671 = vmatpush.msra.mxu0 %v86
    %672 = vmatpush.msra.mxu0 %v84
    %673 = vmatpush.msra.mxu0 %v82
    %674 = vmatpush.msra.mxu0 %v80
    %675 = vmatmul.f32.gmra.mxu0 %v648
    %v676 = vpop.f32.mrf.mxu0
    %v677 = vadd.f32 0.0, %v676
    %678 = vmatmul.f32.gmra.mxu0 %v651
    %v679 = vpop.f32.mrf.mxu0
    %v680 = vadd.f32 0.0, %v679
    %681 = vmatmul.f32.gmra.mxu0 %v654
    %v682 = vpop.f32.mrf.mxu0
    %v683 = vadd.f32 0.0, %v682
    %684 = vmatmul.f32.gmra.mxu0 %v657
    %v685 = vpop.f32.mrf.mxu0
    %v686 = vadd.f32 0.0, %v685
    %687 = vdwg.mxu0
    %688 = vmatpush.msra.mxu0 0.0
    %689 = vmatpush.msra.mxu0 0.0
    %690 = vmatpush.msra.mxu0 0.0
    %691 = vmatpush.msra.mxu0 0.0
    %692 = vmatpush.msra.mxu0 0.0
    %693 = vmatpush.msra.mxu0 0.0
    %694 = vmatpush.msra.mxu0 0.0
    %695 = vmatpush.msra.mxu0 %v334
    %696 = vmatpush.msra.mxu0 %v95
    %697 = vmatpush.msra.mxu0 %v93
    %698 = vmatpush.msra.mxu0 %v91
    %699 = vmatpush.msra.mxu0 %v89
    %700 = vmatpush.msra.mxu0 %v87
    %701 = vmatpush.msra.mxu0 %v85
    %702 = vmatpush.msra.mxu0 %v83
    %703 = vmatpush.msra.mxu0 %v81
    %704 = vmatmul.f32.gmra.mxu0 %v648
    %v705 = vpop.f32.mrf.mxu0
    %v706 = vadd.f32 0.0, %v705
    %707 = vmatmul.f32.gmra.mxu0 %v651
    %v708 = vpop.f32.mrf.mxu0
    %v709 = vadd.f32 0.0, %v708
    %710 = vmatmul.f32.gmra.mxu0 %v654
    %v711 = vpop.f32.mrf.mxu0
    %v712 = vadd.f32 0.0, %v711
    %713 = vmatmul.f32.gmra.mxu0 %v657
    %v714 = vpop.f32.mrf.mxu0
    %v715 = vadd.f32 0.0, %v714
    %716 = vdwg.mxu0
    %vm717 = vcmask 130048
    %v719 = vsel %vm717, %v635, 0
    %v722 = vsel %vm717, %v636, 0
    %v725 = vsel %vm717, %v645, 0
    %v728 = vsel %vm717, %v646, 0
    %730 = vmatpush.msra.mxu0 0.0
    %731 = vmatpush.msra.mxu0 0.0
    %732 = vmatpush.msra.mxu0 0.0
    %733 = vmatpush.msra.mxu0 0.0
    %734 = vmatpush.msra.mxu0 0.0
    %735 = vmatpush.msra.mxu0 0.0
    %736 = vmatpush.msra.mxu0 0.0
    %737 = vmatpush.msra.mxu0 0.0
    %738 = vmatpush.msra.mxu0 0.0
    %739 = vmatpush.msra.mxu0 0.0
    %740 = vmatpush.msra.mxu0 0.0
    %741 = vmatpush.msra.mxu0 0.0
    %742 = vmatpush.msra.mxu0 0.0
    %743 = vmatpush.msra.mxu0 0.0
    %744 = vmatpush.msra.mxu0 %v437
    %745 = vmatpush.msra.mxu0 %v435
    %746 = vmatmul.f32.gmra.mxu0 %v719
    %v747 = vpop.f32.mrf.mxu0
    %v748 = vadd.f32 %v677, %v747
    %749 = vmatmul.f32.gmra.mxu0 %v722
    %v750 = vpop.f32.mrf.mxu0
    %v751 = vadd.f32 %v680, %v750
    %752 = vmatmul.f32.gmra.mxu0 %v725
    %v753 = vpop.f32.mrf.mxu0
    %v754 = vadd.f32 %v683, %v753
    %755 = vmatmul.f32.gmra.mxu0 %v728
    %v756 = vpop.f32.mrf.mxu0
    %v757 = vadd.f32 %v686, %v756
    %758 = vdwg.mxu0
    %759 = vmatpush.msra.mxu0 0.0
    %760 = vmatpush.msra.mxu0 0.0
    %761 = vmatpush.msra.mxu0 0.0
    %762 = vmatpush.msra.mxu0 0.0
    %763 = vmatpush.msra.mxu0 0.0
    %764 = vmatpush.msra.mxu0 0.0
    %765 = vmatpush.msra.mxu0 0.0
    %766 = vmatpush.msra.mxu0 0.0
    %767 = vmatpush.msra.mxu0 0.0
    %768 = vmatpush.msra.mxu0 0.0
    %769 = vmatpush.msra.mxu0 0.0
    %770 = vmatpush.msra.mxu0 0.0
    %771 = vmatpush.msra.mxu0 0.0
    %772 = vmatpush.msra.mxu0 0.0
    %773 = vmatpush.msra.mxu0 %v438
    %774 = vmatpush.msra.mxu0 %v436
    %775 = vmatmul.f32.gmra.mxu0 %v719
    %v776 = vpop.f32.mrf.mxu0
    %v777 = vadd.f32 %v706, %v776
    %778 = vmatmul.f32.gmra.mxu0 %v722
    %v779 = vpop.f32.mrf.mxu0
    %v780 = vadd.f32 %v709, %v779
    %781 = vmatmul.f32.gmra.mxu0 %v725
    %v782 = vpop.f32.mrf.mxu0
    %v783 = vadd.f32 %v712, %v782
    %784 = vmatmul.f32.gmra.mxu0 %v728
    %v785 = vpop.f32.mrf.mxu0
    %v786 = vadd.f32 %v715, %v785
    %787 = vdwg.mxu0
    %v788 = vmax.f32 %v748, 0.0
    %v789 = vmax.f32 %v777, 0.0
    %v790 = vmax.f32 %v751, 0.0
    %v791 = vmax.f32 %v780, 0.0
    %v792 = vmax.f32 %v754, 0.0
    %v793 = vmax.f32 %v783, 0.0
    %v794 = vmax.f32 %v757, 0.0
    %v795 = vmax.f32 %v786, 0.0
    %796 = vmatpush.msra.mxu0 %v63
    %797 = vmatpush.msra.mxu0 %v62
    %798 = vmatpush.msra.mxu0 %v61
    %799 = vmatpush.msra.mxu0 %v60
    %800 = vmatpush.msra.mxu0 %v59
    %801 = vmatpush.msra.mxu0 %v58
    %802 = vmatpush.msra.mxu0 %v57
    %803 = vmatpush.msra.mxu0 %v56
    %804 = vmatpush.msra.mxu0 %v55
    %805 = vmatpush.msra.mxu0 %v54
    %806 = vmatpush.msra.mxu0 %v53
    %807 = vmatpush.msra.mxu0 %v52
    %808 = vmatpush.msra.mxu0 %v51
    %809 = vmatpush.msra.mxu0 %v50
    %810 = vmatpush.msra.mxu0 %v49
    %811 = vmatpush.msra.mxu0 %v48
    %812 = vmatmul.f32.gmra.mxu0 %v788
    %v813 = vpop.f32.mrf.mxu0
    %v814 = vadd.f32 0.0, %v813
    %815 = vmatmul.f32.gmra.mxu0 %v790
    %v816 = vpop.f32.mrf.mxu0
    %v817 = vadd.f32 0.0, %v816
    %818 = vdwg.mxu0
    %819 = vmatpush.msra.mxu0 %v79
    %820 = vmatpush.msra.mxu0 %v78
    %821 = vmatpush.msra.mxu0 %v77
    %822 = vmatpush.msra.mxu0 %v76
    %823 = vmatpush.msra.mxu0 %v75
    %824 = vmatpush.msra.mxu0 %v74
    %825 = vmatpush.msra.mxu0 %v73
    %826 = vmatpush.msra.mxu0 %v72
    %827 = vmatpush.msra.mxu0 %v71
    %828 = vmatpush.msra.mxu0 %v70
    %829 = vmatpush.msra.mxu0 %v69
    %830 = vmatpush.msra.mxu0 %v68
    %831 = vmatpush.msra.mxu0 %v67
    %832 = vmatpush.msra.mxu0 %v66
    %833 = vmatpush.msra.mxu0 %v65
    %834 = vmatpush.msra.mxu0 %v64
    %835 = vmatmul.f32.gmra.mxu0 %v789
    %v836 = vpop.f32.mrf.mxu0
    %v837 = vadd.f32 %v814, %v836
    %838 = vmatmul.f32.gmra.mxu0 %v791
    %v839 = vpop.f32.mrf.mxu0
    %v840 = vadd.f32 %v817, %v839
    %841 = vdwg.mxu0
    %v843 = vsel %vm717, %v132, 0
    %845 = vmatpush.msra.mxu0 0.0
    %846 = vmatpush.msra.mxu0 0.0
    %847 = vmatpush.msra.mxu0 0.0
    %848 = vmatpush.msra.mxu0 0.0
    %849 = vmatpush.msra.mxu0 0.0
    %850 = vmatpush.msra.mxu0 0.0
    %851 = vmatpush.msra.mxu0 0.0
    %852 = vmatpush.msra.mxu0 0.0
    %853 = vmatpush.msra.mxu0 0.0
    %854 = vmatpush.msra.mxu0 0.0
    %855 = vmatpush.msra.mxu0 0.0
    %856 = vmatpush.msra.mxu0 0.0
    %857 = vmatpush.msra.mxu0 0.0
    %858 = vmatpush.msra.mxu0 0.0
    %859 = vmatpush.msra.mxu0 %v840
    %860 = vmatpush.msra.mxu0 %v837
    %861 = vmatmul.f32.gmra.mxu0 %v843
    %v862 = vpop.f32.mrf.mxu0
    %v863 = vadd.f32 0.0, %v862
    %864 = vdwg.mxu0
    %867 = vrot.lane.b32.xlu0 %v837, 96
    %v868 = vpop.permute.xlu0 %867
    %869 = vrot.lane.b32.xlu0 %v840, 96
    %v870 = vpop.permute.xlu0 %869
    %v874 = vsel %vm717, %v133, 0
    %876 = vmatpush.msra.mxu0 0.0
    %877 = vmatpush.msra.mxu0 0.0
    %878 = vmatpush.msra.mxu0 0.0
    %879 = vmatpush.msra.mxu0 0.0
    %880 = vmatpush.msra.mxu0 0.0
    %881 = vmatpush.msra.mxu0 0.0
    %882 = vmatpush.msra.mxu0 0.0
    %883 = vmatpush.msra.mxu0 0.0
    %884 = vmatpush.msra.mxu0 0.0
    %885 = vmatpush.msra.mxu0 0.0
    %886 = vmatpush.msra.mxu0 0.0
    %887 = vmatpush.msra.mxu0 0.0
    %888 = vmatpush.msra.mxu0 0.0
    %889 = vmatpush.msra.mxu0 0.0
    %890 = vmatpush.msra.mxu0 %v870
    %891 = vmatpush.msra.mxu0 %v868
    %892 = vmatmul.f32.gmra.mxu0 %v874
    %v893 = vpop.f32.mrf.mxu0
    %v894 = vadd.f32 0.0, %v893
    %895 = vdwg.mxu0
    %897 = vset.pattern.permute.xlu0 0
    %898 = vperm.xlu0 %897, %v135
    %v899 = vpop.permute.xlu0 %898
    %901 = vrot.lane.b32.xlu0 %v837, 64
    %v902 = vpop.permute.xlu0 %901
    %903 = vrot.lane.b32.xlu0 %v840, 64
    %v904 = vpop.permute.xlu0 %903
    %v908 = vsel %vm717, %v134, 0
    %910 = vmatpush.msra.mxu0 0.0
    %911 = vmatpush.msra.mxu0 0.0
    %912 = vmatpush.msra.mxu0 0.0
    %913 = vmatpush.msra.mxu0 0.0
    %914 = vmatpush.msra.mxu0 0.0
    %915 = vmatpush.msra.mxu0 0.0
    %916 = vmatpush.msra.mxu0 0.0
    %917 = vmatpush.msra.mxu0 0.0
    %918 = vmatpush.msra.mxu0 0.0
    %919 = vmatpush.msra.mxu0 0.0
    %920 = vmatpush.msra.mxu0 0.0
    %921 = vmatpush.msra.mxu0 0.0
    %922 = vmatpush.msra.mxu0 0.0
    %923 = vmatpush.msra.mxu0 0.0
    %924 = vmatpush.msra.mxu0 %v904
    %925 = vmatpush.msra.mxu0 %v902
    %926 = vmatmul.f32.gmra.mxu0 %v908
    %v927 = vpop.f32.mrf.mxu0
    %v928 = vadd.f32 %v899, %v927
    %929 = vdwg.mxu0
    %931 = vrot.lane.b32.xlu0 %v894, 32
    %v932 = vpop.permute.xlu0 %931
    %935 = vrot.lane.b32.xlu0 %v928, 64
    %v936 = vpop.permute.xlu0 %935
    %v938 = vsel %vm289, %v863, %v932
    %v939 = vsel %vm291, %v938, %v936
    %941 = vrot.lane.b32.xlu0 %v131, 16
    %v942 = vpop.permute.xlu0 %941
    %v944 = vsel %vm717, %v130, %v942
    %v946 = vsel %vm323, %v939, 0
    %948 = vmatpush.msra.mxu0 0.0
    %949 = vmatpush.msra.mxu0 0.0
    %950 = vmatpush.msra.mxu0 0.0
    %951 = vmatpush.msra.mxu0 0.0
    %952 = vmatpush.msra.mxu0 0.0
    %953 = vmatpush.msra.mxu0 0.0
    %954 = vmatpush.msra.mxu0 0.0
    %955 = vmatpush.msra.mxu0 %v331
    %956 = vmatpush.msra.mxu0 %v94
    %957 = vmatpush.msra.mxu0 %v92
    %958 = vmatpush.msra.mxu0 %v90
    %959 = vmatpush.msra.mxu0 %v88
    %960 = vmatpush.msra.mxu0 %v86
    %961 = vmatpush.msra.mxu0 %v84
    %962 = vmatpush.msra.mxu0 %v82
    %963 = vmatpush.msra.mxu0 %v80
    %964 = vmatmul.f32.gmra.mxu0 %v946
    %v965 = vpop.f32.mrf.mxu0
    %v966 = vadd.f32 0.0, %v965
    %967 = vdwg.mxu0
    %968 = vmatpush.msra.mxu0 0.0
    %969 = vmatpush.msra.mxu0 0.0
    %970 = vmatpush.msra.mxu0 0.0
    %971 = vmatpush.msra.mxu0 0.0
    %972 = vmatpush.msra.mxu0 0.0
    %973 = vmatpush.msra.mxu0 0.0
    %974 = vmatpush.msra.mxu0 0.0
    %975 = vmatpush.msra.mxu0 %v334
    %976 = vmatpush.msra.mxu0 %v95
    %977 = vmatpush.msra.mxu0 %v93
    %978 = vmatpush.msra.mxu0 %v91
    %979 = vmatpush.msra.mxu0 %v89
    %980 = vmatpush.msra.mxu0 %v87
    %981 = vmatpush.msra.mxu0 %v85
    %982 = vmatpush.msra.mxu0 %v83
    %983 = vmatpush.msra.mxu0 %v81
    %984 = vmatmul.f32.gmra.mxu0 %v946
    %v985 = vpop.f32.mrf.mxu0
    %v986 = vadd.f32 0.0, %v985
    %987 = vdwg.mxu0
    %v989 = vsel %vm289, %v944, 0
    %991 = vmatpush.msra.mxu0 0.0
    %992 = vmatpush.msra.mxu0 0.0
    %993 = vmatpush.msra.mxu0 0.0
    %994 = vmatpush.msra.mxu0 0.0
    %995 = vmatpush.msra.mxu0 0.0
    %996 = vmatpush.msra.mxu0 0.0
    %997 = vmatpush.msra.mxu0 0.0
    %998 = vmatpush.msra.mxu0 0.0
    %999 = vmatpush.msra.mxu0 0.0
    %1000 = vmatpush.msra.mxu0 0.0
    %1001 = vmatpush.msra.mxu0 0.0
    %1002 = vmatpush.msra.mxu0 0.0
    %1003 = vmatpush.msra.mxu0 %v794
    %1004 = vmatpush.msra.mxu0 %v792
    %1005 = vmatpush.msra.mxu0 %v790
    %1006 = vmatpush.msra.mxu0 %v788
    %1007 = vmatmul.f32.gmra.mxu0 %v989
    %v1008 = vpop.f32.mrf.mxu0
    %v1009 = vadd.f32 %v966, %v1008
    %1010 = vdwg.mxu0
    %1011 = vmatpush.msra.mxu0 0.0
    %1012 = vmatpush.msra.mxu0 0.0
    %1013 = vmatpush.msra.mxu0 0.0
    %1014 = vmatpush.msra.mxu0 0.0
    %1015 = vmatpush.msra.mxu0 0.0
    %1016 = vmatpush.msra.mxu0 0.0
    %1017 = vmatpush.msra.mxu0 0.0
    %1018 = vmatpush.msra.mxu0 0.0
    %1019 = vmatpush.msra.mxu0 0.0
    %1020 = vmatpush.msra.mxu0 0.0
    %1021 = vmatpush.msra.mxu0 0.0
    %1022 = vmatpush.msra.mxu0 0.0
    %1023 = vmatpush.msra.mxu0 %v795
    %1024 = vmatpush.msra.mxu0 %v793
    %1025 = vmatpush.msra.mxu0 %v791
    %1026 = vmatpush.msra.mxu0 %v789
    %1027 = vmatmul.f32.gmra.mxu0 %v989
    %v1028 = vpop.f32.mrf.mxu0
    %v1029 = vadd.f32 %v986, %v1028
    %1030 = vdwg.mxu0
    %1031 = vmatpush.msra.mxu0 %v113
    %1032 = vmatpush.msra.mxu0 %v112
    %1033 = vmatpush.msra.mxu0 %v111
    %1034 = vmatpush.msra.mxu0 %v110
    %1035 = vmatpush.msra.mxu0 %v109
    %1036 = vmatpush.msra.mxu0 %v108
    %1037 = vmatpush.msra.mxu0 %v107
    %1038 = vmatpush.msra.mxu0 %v106
    %1039 = vmatpush.msra.mxu0 %v105
    %1040 = vmatpush.msra.mxu0 %v104
    %1041 = vmatpush.msra.mxu0 %v103
    %1042 = vmatpush.msra.mxu0 %v102
    %1043 = vmatpush.msra.mxu0 %v101
    %1044 = vmatpush.msra.mxu0 %v100
    %1045 = vmatpush.msra.mxu0 %v99
    %1046 = vmatpush.msra.mxu0 %v98
    %1047 = vmatmul.f32.gmra.mxu0 %v788
    %v1048 = vpop.f32.mrf.mxu0
    %v1049 = vadd.f32 0.0, %v1048
    %1050 = vmatmul.f32.gmra.mxu0 %v790
    %v1051 = vpop.f32.mrf.mxu0
    %v1052 = vadd.f32 0.0, %v1051
    %1053 = vdwg.mxu0
    %1054 = vmatpush.msra.mxu0 %v129
    %1055 = vmatpush.msra.mxu0 %v128
    %1056 = vmatpush.msra.mxu0 %v127
    %1057 = vmatpush.msra.mxu0 %v126
    %1058 = vmatpush.msra.mxu0 %v125
    %1059 = vmatpush.msra.mxu0 %v124
    %1060 = vmatpush.msra.mxu0 %v123
    %1061 = vmatpush.msra.mxu0 %v122
    %1062 = vmatpush.msra.mxu0 %v121
    %1063 = vmatpush.msra.mxu0 %v120
    %1064 = vmatpush.msra.mxu0 %v119
    %1065 = vmatpush.msra.mxu0 %v118
    %1066 = vmatpush.msra.mxu0 %v117
    %1067 = vmatpush.msra.mxu0 %v116
    %1068 = vmatpush.msra.mxu0 %v115
    %1069 = vmatpush.msra.mxu0 %v114
    %1070 = vmatmul.f32.gmra.mxu0 %v789
    %v1071 = vpop.f32.mrf.mxu0
    %v1072 = vadd.f32 %v1049, %v1071
    %1073 = vmatmul.f32.gmra.mxu0 %v791
    %v1074 = vpop.f32.mrf.mxu0
    %v1075 = vadd.f32 %v1052, %v1074
    %1076 = vdwg.mxu0
    %1078 = vrot.lane.b32.xlu0 %v137, 16
    %v1079 = vpop.permute.xlu0 %1078
    %1082 = vrot.lane.b32.xlu0 %v138, 32
    %v1083 = vpop.permute.xlu0 %1082
    %v1085 = vsel %vm717, %v136, %v1079
    %v1086 = vsel %vm289, %v1085, %v1083
    %1088 = vset.pattern.permute.xlu0 0
    %1089 = vperm.xlu0 %1088, %v139
    %v1090 = vpop.permute.xlu0 %1089
    %vm1092 = vcmask 392192
    %v1094 = vsel %vm1092, %v1086, 0
    %1096 = vmatpush.msra.mxu0 0.0
    %1097 = vmatpush.msra.mxu0 0.0
    %1098 = vmatpush.msra.mxu0 0.0
    %1099 = vmatpush.msra.mxu0 0.0
    %1100 = vmatpush.msra.mxu0 0.0
    %1101 = vmatpush.msra.mxu0 0.0
    %1102 = vmatpush.msra.mxu0 0.0
    %1103 = vmatpush.msra.mxu0 0.0
    %1104 = vmatpush.msra.mxu0 0.0
    %1105 = vmatpush.msra.mxu0 0.0
    %1106 = vmatpush.msra.mxu0 %v870
    %1107 = vmatpush.msra.mxu0 %v868
    %1108 = vmatpush.msra.mxu0 %v840
    %1109 = vmatpush.msra.mxu0 %v837
    %1110 = vmatpush.msra.mxu0 %v1075
    %1111 = vmatpush.msra.mxu0 %v1072
    %1112 = vmatmul.f32.gmra.mxu0 %v1094
    %v1113 = vpop.f32.mrf.mxu0
    %v1114 = vadd.f32 %v1090, %v1113
    %1115 = vdwg.mxu0
    %v1118 = vrot.slane %v1029, 4
    %v1119 = vsel %vm198, %v1009, %v1118
    %1121 = vst [vmem:[#allocation2] sm:$0xff] %v1119
    %v1123 = vsel %vm289, %v1114, 0
    %1125 = vmatpush.msra.mxu0 0.0
    %1126 = vmatpush.msra.mxu0 0.0
    %1127 = vmatpush.msra.mxu0 0.0
    %1128 = vmatpush.msra.mxu0 0.0
    %1129 = vmatpush.msra.mxu0 0.0
    %1130 = vmatpush.msra.mxu0 0.0
    %1131 = vmatpush.msra.mxu0 0.0
    %1132 = vmatpush.msra.mxu0 0.0
    %1133 = vmatpush.msra.mxu0 0.0
    %1134 = vmatpush.msra.mxu0 0.0
    %1135 = vmatpush.msra.mxu0 0.0
    %1136 = vmatpush.msra.mxu0 0.0
    %1137 = vmatpush.msra.mxu0 %v86
    %1138 = vmatpush.msra.mxu0 %v84
    %1139 = vmatpush.msra.mxu0 %v82
    %1140 = vmatpush.msra.mxu0 %v80
    %1141 = vmatmul.f32.gmra.mxu0 %v1123
    %v1142 = vpop.f32.mrf.mxu0
    %v1143 = vadd.f32 0.0, %v1142
    %1144 = vdwg.mxu0
    %1145 = vmatpush.msra.mxu0 0.0
    %1146 = vmatpush.msra.mxu0 0.0
    %1147 = vmatpush.msra.mxu0 0.0
    %1148 = vmatpush.msra.mxu0 0.0
    %1149 = vmatpush.msra.mxu0 0.0
    %1150 = vmatpush.msra.mxu0 0.0
    %1151 = vmatpush.msra.mxu0 0.0
    %1152 = vmatpush.msra.mxu0 0.0
    %1153 = vmatpush.msra.mxu0 0.0
    %1154 = vmatpush.msra.mxu0 0.0
    %1155 = vmatpush.msra.mxu0 0.0
    %1156 = vmatpush.msra.mxu0 0.0
    %1157 = vmatpush.msra.mxu0 %v87
    %1158 = vmatpush.msra.mxu0 %v85
    %1159 = vmatpush.msra.mxu0 %v83
    %1160 = vmatpush.msra.mxu0 %v81
    %1161 = vmatmul.f32.gmra.mxu0 %v1123
    %v1162 = vpop.f32.mrf.mxu0
    %v1163 = vadd.f32 0.0, %v1162
    %1164 = vdwg.mxu0
    %v1167 = vrot.slane %v1163, 4
    %v1168 = vsel %vm198, %v1143, %v1167
    %1170 = vst [vmem:[#allocation4] sm:$0x77] %v1168
    // Predicated region
    $region54: #{tpu_custom_call.1} parent=1 // pred_check
      _
    $region55: #{tpu_custom_call.1} parent=1 // pred_check_branch
      %1172 = sbr.rel (0) target = $region57
    $region56: #{tpu_custom_call.1} parent=1 // pred_region
      %1174 = vsyncadd [#allocation3], 0
      %s1176 = sshll.u32 [#allocation2], 4
      %s1177 = int_to_ptr.vmem [resolvable:$true] %s1176
      %s1178 = sshll.u32 %s13, 4
      %s1179 = int_to_ptr.hbm [resolvable:$true] %s1178
      %1181 = dma.vmem_to_hbm [thread:$0]  %s1177, 128, %s1179, [#allocation3]
    $region57: #{tpu_custom_call.1} parent=1 // pred_fallthru
      _
    // Predicated region
    $region58: #{tpu_custom_call.1} parent=1 // pred_check
      _
    $region59: #{tpu_custom_call.1} parent=1 // pred_check_branch
      %1183 = sbr.rel (0) target = $region61
    $region60: #{tpu_custom_call.1} parent=1 // pred_region
      %1185 = vsyncadd [#allocation5], 0
      %s1187 = sshll.u32 [#allocation4], 4
      %s1188 = int_to_ptr.vmem [resolvable:$true] %s1187
      %s1189 = sshll.u32 %s14, 4
      %s1190 = int_to_ptr.hbm [resolvable:$true] %s1189
      %1192 = dma.vmem_to_hbm [thread:$0]  %s1188, 128, %s1190, [#allocation5]
    $region61: #{tpu_custom_call.1} parent=1 // pred_fallthru
      _
    // Predicated region
    $region62: #{tpu_custom_call.1} parent=1 // pred_check
      _
    $region63: #{tpu_custom_call.1} parent=1 // pred_check_branch
      %1194 = sbr.rel (0) target = $region65
    $region64: #{tpu_custom_call.1} parent=1 // pred_region
      %1196 = dma.done [#allocation3], 128
    $region65: #{tpu_custom_call.1} parent=1 // pred_fallthru
      _
    // Predicated region
    $region66: #{tpu_custom_call.1} parent=1 // pred_check
      _
    $region67: #{tpu_custom_call.1} parent=1 // pred_check_branch
      %1198 = sbr.rel (0) target = $region69
    $region68: #{tpu_custom_call.1} parent=1 // pred_region
      %1200 = dma.done [#allocation5], 128
    $region69: #{tpu_custom_call.1} parent=1 // pred_fallthru
      _
    %1201 = vsyncpa [#allocation3], 1
    %1202 = vsyncpa [#allocation5], 1

</llo_original>
